<compile_context>
chip_gen: v5e
topology: v5e:2x2
jax: 0.10.0
libtpu: 0.0.40
codegen_flags: <defaults>
</compile_context>

<pallas_src>
import functools
import math

import jax
import jax.numpy as jnp
from jax import lax
from jax.experimental import pallas as pl
from jax.experimental.pallas import tpu as pltpu

EPS = 1e-6


# ---------------------------------------------------------------------------
# fused whole-encoder kernel
# ---------------------------------------------------------------------------
def encoder_stack_kernel(x_ref, mask_ref,
                         ln1_a_ref, ln1_b_ref, wqkv_ref, bqkv_ref,
                         wo_ref, bo_ref, ln2_a_ref, ln2_b_ref,
                         w1_ref, b1_ref, w2_ref, b2_ref,
                         fn_a_ref, fn_b_ref,
                         o_ref, x_scratch,
                         *, num_heads, d_real, compute_dtype):
    layer = pl.program_id(1)
    n_layers = pl.num_programs(1)

    Bt, S, Dp = x_scratch.shape
    H = num_heads
    dkp = Dp // H                       # padded per-head dim
    dk = d_real // H                    # real per-head dim (for the 1/sqrt(dk) scale)
    N = Bt * S
    inv_sqrt_dk = 1.0 / math.sqrt(dk)
    cd = compute_dtype

    # first layer step for this batch block: load residual stream into VMEM
    @pl.when(layer == 0)
    def _():
        x_scratch[...] = x_ref[...].astype(jnp.float32)

    x = x_scratch[...].reshape(N, Dp)          # residual stream; padded cols == 0
    masked = mask_ref[...] < 0.5               # (Bt, 1, S); True = do not attend

    # LN stats over the REAL model dim only (padded residual columns are zero,
    # so only the centered term needs masking).
    col_valid = (lax.broadcasted_iota(jnp.int32, (1, Dp), 1)
                 < d_real).astype(jnp.float32)

    def layernorm(z, alpha, bias):
        # PyTorch reference: alpha * (z - mean) / (std + eps) + bias, unbiased std.
        mean = jnp.sum(z, axis=-1, keepdims=True) * (1.0 / d_real)
        cen = (z - mean) * col_valid
        var = jnp.sum(cen * cen, axis=-1, keepdims=True) * (1.0 / (d_real - 1))
        return alpha * (z - mean) / (jnp.sqrt(var) + EPS) + bias

    def attention(q, k, v):
        # q/k/v: (N, Dp) f32.  Heads are folded into the einsum batch axis so
        # the whole thing is one batched MXU matmul (no per-row Python loop,
        # no lane-axis concatenate).
        if Bt == 1:
            q3 = q.reshape(S, H, dkp).astype(cd)
            k3 = k.reshape(S, H, dkp).astype(cd)
            v3 = v.reshape(S, H, dkp).astype(cd)
            s = jnp.einsum('qhd,khd->hqk', q3, k3,
                           preferred_element_type=jnp.float32) * inv_sqrt_dk
            s = jnp.where(masked[0], -1e9, s)          # (1,S) over (H,S,S)
            s = s - jnp.max(s, axis=-1, keepdims=True)
            p = jnp.exp(s)
            p = p * pl.reciprocal(jnp.sum(p, axis=-1, keepdims=True), approx=True)
            ctx = jnp.einsum('hqk,khd->qhd', p.astype(cd), v3,
                             preferred_element_type=jnp.float32)
            return ctx.reshape(N, Dp)
        # general (Bt > 1) path: batch dim = Bt * H
        def split(t):
            t = t.reshape(Bt, S, H, dkp)
            t = jnp.swapaxes(t, 1, 2)                  # (Bt, H, S, dkp)
            return t.reshape(Bt * H, S, dkp).astype(cd)
        qh, kh, vh = split(q), split(k), split(v)
        s = jnp.einsum('bqd,bkd->bqk', qh, kh,
                       preferred_element_type=jnp.float32) * inv_sqrt_dk
        s = s.reshape(Bt, H, S, S)
        s = jnp.where(masked[:, :, None, :], -1e9, s).reshape(Bt * H, S, S)
        s = s - jnp.max(s, axis=-1, keepdims=True)
        p = jnp.exp(s)
        p = p * pl.reciprocal(jnp.sum(p, axis=-1, keepdims=True), approx=True)
        ctx = jnp.einsum('bqk,bkd->bqd', p.astype(cd), vh,
                         preferred_element_type=jnp.float32)
        ctx = jnp.swapaxes(ctx.reshape(Bt, H, S, dkp), 1, 2)
        return ctx.reshape(N, Dp)

    # ---- multi-head self-attention sub-layer (pre-norm residual) ----
    y = layernorm(x, ln1_a_ref[0], ln1_b_ref[0]).astype(cd)
    qkv = (jnp.dot(y, wqkv_ref[0], preferred_element_type=jnp.float32)
           + bqkv_ref[0])
    ctx = attention(qkv[:, :Dp], qkv[:, Dp:2 * Dp], qkv[:, 2 * Dp:])
    attn = (jnp.dot(ctx.astype(cd), wo_ref[0],
                    preferred_element_type=jnp.float32) + bo_ref[0])
    x = x + attn

    # ---- feed-forward sub-layer (pre-norm residual) ----
    y2 = layernorm(x, ln2_a_ref[0], ln2_b_ref[0]).astype(cd)
    hdn = jnp.maximum(
        jnp.dot(y2, w1_ref[0], preferred_element_type=jnp.float32) + b1_ref[0],
        0.0)
    ff = (jnp.dot(hdn.astype(cd), w2_ref[0],
                  preferred_element_type=jnp.float32) + b2_ref[0])
    x = x + ff

    x_scratch[...] = x.reshape(Bt, S, Dp)

    # Encoder's final LayerNormalization, emitted only on the last layer step.
    @pl.when(layer == n_layers - 1)
    def _():
        xf = layernorm(x, fn_a_ref[...], fn_b_ref[...])
        o_ref[...] = xf.reshape(Bt, S, Dp).astype(o_ref.dtype)


# ---------------------------------------------------------------------------
# wrapper: padding, weight packing, tiling / VMEM budgeting
# ---------------------------------------------------------------------------
def _round_up(n, m):
    return ((n + m - 1) // m) * m


def _vmem_capacity_bytes():
    # generation-aware budget (v5e/v6e: 128 MiB, v7x: 64 MiB per core)
    try:
        return int(pltpu.get_tpu_info().vmem_capacity_bytes)
    except Exception:
        return 64 << 20  # most conservative fallback


def _step_vmem_bytes(block_b, S, d_pad, dff_pad, num_heads, layer_w_bytes):
    act = block_b * S * d_pad * 4
    io = 2 * (2 * act + block_b * S * 4)            # double-buffered x/out + mask
    interm = block_b * (3 * S * d_pad               # q, k, v
                        + num_heads * S * S         # scores
                        + S * dff_pad               # FFN hidden
                        + 6 * S * d_pad) * 4        # LN / ctx / residual temps
    return io + act + interm + 2 * layer_w_bytes    # scratch + dbl-buffered weights


def _choose_block_b(B, S, d_pad, dff_pad, num_heads, layer_w_bytes, vmem_cap):
    # keep >= 2 steps on the parallel batch axis so both v7x TensorCores work
    cap = max(1, B // 2)
    best = 1
    for bb in range(1, cap + 1):
        if B % bb == 0 and _step_vmem_bytes(
                bb, S, d_pad, dff_pad, num_heads, layer_w_bytes) <= 0.6 * vmem_cap:
            best = bb
    return best


def _pack_params(params, num_heads, d_model, d_pad, d_ff, dff_pad, wdtype):
    """Zero-pad + per-head-pad + stack per-layer weights along a layer axis."""
    H = num_heads
    dk = d_model // H
    dkp = d_pad // H

    def pad_last(a, new):
        return jnp.pad(a, [(0, 0)] * (a.ndim - 1) + [(0, new - a.shape[-1])])

    def pad_first(a, new):
        return jnp.pad(a, [(0, new - a.shape[0])] + [(0, 0)] * (a.ndim - 1))

    def pad_heads_last(a):          # (..., H*dk) -> (..., H*dkp)
        lead = a.shape[:-1]
        ah = a.reshape(lead + (H, dk))
        ah = jnp.pad(ah, [(0, 0)] * len(lead) + [(0, 0), (0, dkp - dk)])
        return ah.reshape(lead + (H * dkp,))

    def pad_heads_first(a):         # (H*dk, ...) -> (H*dkp, ...)
        tail = a.shape[1:]
        ah = a.reshape((H, dk) + tail)
        ah = jnp.pad(ah, [(0, 0), (0, dkp - dk)] + [(0, 0)] * len(tail))
        return ah.reshape((H * dkp,) + tail)

    keys = ("ln1_a", "ln1_b", "wqkv", "bqkv", "wo", "bo",
            "ln2_a", "ln2_b", "w1", "b1", "w2", "b2")
    acc = {k: [] for k in keys}
    for L in params["layers"]:
        acc["ln1_a"].append(pad_last(L["ln1_a"], d_pad))
        acc["ln1_b"].append(pad_last(L["ln1_b"], d_pad))
        wq = pad_first(pad_heads_last(L["wq"]), d_pad)
        wk = pad_first(pad_heads_last(L["wk"]), d_pad)
        wv = pad_first(pad_heads_last(L["wv"]), d_pad)
        acc["wqkv"].append(jnp.concatenate([wq, wk, wv], axis=1).astype(wdtype))
        acc["bqkv"].append(jnp.concatenate(
            [pad_heads_last(L["bq"]), pad_heads_last(L["bk"]),
             pad_heads_last(L["bv"])], axis=1))
        acc["wo"].append(pad_last(pad_heads_first(L["wo"]), d_pad).astype(wdtype))
        acc["bo"].append(pad_last(L["bo"], d_pad))
        acc["ln2_a"].append(pad_last(L["ln2_a"], d_pad))
        acc["ln2_b"].append(pad_last(L["ln2_b"], d_pad))
        acc["w1"].append(pad_last(pad_first(L["w1"], d_pad), dff_pad).astype(wdtype))
        acc["b1"].append(pad_last(L["b1"], dff_pad))
        acc["w2"].append(pad_last(pad_first(L["w2"], dff_pad), d_pad).astype(wdtype))
        acc["b2"].append(pad_last(L["b2"], d_pad))

    packed = {k: jnp.stack(v, axis=0) for k, v in acc.items()}
    packed["fn_a"] = pad_last(params["norm_a"], d_pad)
    packed["fn_b"] = pad_last(params["norm_b"], d_pad)
    return packed


def encoder_forward(x, mask, params, *, num_heads, block_b=None,
                    compute_dtype=jnp.bfloat16):
    B, S, D = x.shape
    H = num_heads
    assert D % H == 0
    d_pad = _round_up(D, 128)
    assert d_pad % H == 0, "num_heads must divide the padded model dim"
    d_ff = params["layers"][0]["w1"].shape[1]
    dff_pad = _round_up(d_ff, 128)
    n_layers = len(params["layers"])

    packed = _pack_params(params, H, D, d_pad, d_ff, dff_pad, compute_dtype)
    stacked_names = ("ln1_a", "ln1_b", "wqkv", "bqkv", "wo", "bo",
                     "ln2_a", "ln2_b", "w1", "b1", "w2", "b2")
    stacked = [packed[k] for k in stacked_names]
    layer_w_bytes = sum(int(math.prod(a.shape[1:])) * a.dtype.itemsize
                        for a in stacked)

    vmem_cap = _vmem_capacity_bytes()
    if block_b is None:
        block_b = _choose_block_b(B, S, d_pad, dff_pad, H, layer_w_bytes, vmem_cap)
    assert B % block_b == 0

    xp = jnp.pad(x, ((0, 0), (0, 0), (0, d_pad - D)))   # zero-pad model dim

    batch_map = lambda b, l: (b, 0, 0)
    layer_map = lambda b, l: (l, 0, 0)
    const_map = lambda b, l: (0, 0)

    in_specs = ([pl.BlockSpec((block_b, S, d_pad), batch_map),
                 pl.BlockSpec((block_b, 1, S), batch_map)]
                # per-layer weight stacks: indexed by the layer grid axis, so the
                # next layer's weights prefetch while the current layer computes.
                + [pl.BlockSpec((1,) + a.shape[1:], layer_map) for a in stacked]
                + [pl.BlockSpec(packed["fn_a"].shape, const_map),
                   pl.BlockSpec(packed["fn_b"].shape, const_map)])

    vmem_limit = int(min(
        max(2 * _step_vmem_bytes(block_b, S, d_pad, dff_pad, H, layer_w_bytes),
            32 << 20),
        int(0.9 * vmem_cap)))

    out = pl.pallas_call(
        functools.partial(encoder_stack_kernel, num_heads=H, d_real=D,
                          compute_dtype=compute_dtype),
        out_shape=jax.ShapeDtypeStruct((B, S, d_pad), jnp.float32),
        grid_spec=pltpu.PrefetchScalarGridSpec(
            num_scalar_prefetch=0,
            grid=(B // block_b, n_layers),
            in_specs=in_specs,
            out_specs=pl.BlockSpec((block_b, S, d_pad), batch_map),
            scratch_shapes=[pltpu.VMEM((block_b, S, d_pad), jnp.float32)],
        ),
        compiler_params=pltpu.CompilerParams(
            dimension_semantics=("parallel", "arbitrary"),
            vmem_limit_bytes=vmem_limit),
    )(xp, mask, *stacked, packed["fn_a"], packed["fn_b"])

    return out[..., :D]


# ---------------- pure-JAX reference (for verification) ----------------
def _ref_forward(x, mask, params, *, num_heads):
    def ln(x, a, b):
        d = x.shape[-1]
        m = jnp.mean(x, axis=-1, keepdims=True)
        std = jnp.sqrt(jnp.sum((x - m) ** 2, axis=-1, keepdims=True) / (d - 1))
        return a * (x - m) / (std + EPS) + b

    B, S, D = x.shape
    for L in params["layers"]:
        y = ln(x, L["ln1_a"], L["ln1_b"])
        q = y @ L["wq"] + L["bq"]
        k = y @ L["wk"] + L["bk"]
        v = y @ L["wv"] + L["bv"]
        dk = D // num_heads
        qh = q.reshape(B, S, num_heads, dk).transpose(0, 2, 1, 3)
        kh = k.reshape(B, S, num_heads, dk).transpose(0, 2, 1, 3)
        vh = v.reshape(B, S, num_heads, dk).transpose(0, 2, 1, 3)
        s = jnp.einsum("bhqd,bhkd->bhqk", qh, kh) / math.sqrt(dk)
        s = jnp.where(mask[:, None, :, :] == 0, -1e9, s)
        p = jax.nn.softmax(s, axis=-1)
        ctx = jnp.einsum("bhqk,bhkd->bhqd", p, vh).transpose(0, 2, 1, 3).reshape(B, S, D)
        x = x + (ctx @ L["wo"] + L["bo"])
        y2 = ln(x, L["ln2_a"], L["ln2_b"])
        x = x + (jnp.maximum(y2 @ L["w1"] + L["b1"], 0.0) @ L["w2"] + L["b2"])
    return ln(x, params["norm_a"], params["norm_b"])


def init_params(key, num_layers, d_model, d_ff):
    def dense(k, shape):
        return jax.random.normal(k, shape, jnp.float32) * 0.02

    params = {"layers": []}
    for _ in range(num_layers):
        key, *ks = jax.random.split(key, 7)
        params["layers"].append({
            "ln1_a": jnp.ones((1, d_model), jnp.float32),
            "ln1_b": jnp.zeros((1, d_model), jnp.float32),
            "wq": dense(ks[0], (d_model, d_model)), "bq": jnp.zeros((1, d_model), jnp.float32),
            "wk": dense(ks[1], (d_model, d_model)), "bk": jnp.zeros((1, d_model), jnp.float32),
            "wv": dense(ks[2], (d_model, d_model)), "bv": jnp.zeros((1, d_model), jnp.float32),
            "wo": dense(ks[3], (d_model, d_model)), "bo": jnp.zeros((1, d_model), jnp.float32),
            "ln2_a": jnp.ones((1, d_model), jnp.float32),
            "ln2_b": jnp.zeros((1, d_model), jnp.float32),
            "w1": dense(ks[4], (d_model, d_ff)), "b1": jnp.zeros((1, d_ff), jnp.float32),
            "w2": dense(ks[5], (d_ff, d_model)), "b2": jnp.zeros((1, d_model), jnp.float32),
        })
    params["norm_a"] = jnp.ones((1, d_model), jnp.float32)
    params["norm_b"] = jnp.zeros((1, d_model), jnp.float32)
    return params


if __name__ == "__main__":
    B, S, D = 2, 8, 32
    NUM_HEADS = 4
    D_FF = 128
    NUM_LAYERS = 2

    key = jax.random.PRNGKey(0)
    kx, kp = jax.random.split(key)
    x = jax.random.normal(kx, (B, S, D), jnp.float32)
    # source mask: batch 0 fully visible, batch 1 has last 2 positions masked out
    mask = jnp.ones((B, 1, S), jnp.float32)
    mask = mask.at[1, 0, -2:].set(0.0)

    params = init_params(kp, NUM_LAYERS, D, D_FF)
    ref = _ref_forward(x, mask, params, num_heads=NUM_HEADS)

    # exact-precision path: proves semantic parity with the PyTorch reference
    out_f32 = jax.block_until_ready(
        encoder_forward(x, mask, params, num_heads=NUM_HEADS,
                        compute_dtype=jnp.float32))
    assert out_f32.shape == (B, S, D)
    err_f32 = float(jnp.max(jnp.abs(out_f32 - ref)))
    assert jnp.allclose(out_f32, ref, atol=2e-3, rtol=2e-3), \
        f"f32 kernel mismatch vs reference (max abs err={err_f32})"

    # bf16-operand path (default perf configuration)
    out = jax.block_until_ready(
        encoder_forward(x, mask, params, num_heads=NUM_HEADS))
    assert out.shape == (B, S, D)
    assert bool(jnp.all(jnp.isfinite(out)))
    err_bf16 = float(jnp.max(jnp.abs(out - ref)))
    assert jnp.allclose(out, ref, atol=2e-2, rtol=2e-2), \
        f"bf16 kernel mismatch vs reference (max abs err={err_bf16})"

    print("KERNEL_OK")
</pallas_src>

<mosaic_0001>
module attributes {stable_mosaic.version = 11 : i64} {
  func.func @encoder_stack_kernel(%arg0: i32, %arg1: i32, %arg2: memref<1x8x128xf32, #tpu.memory_space<vmem>>, %arg3: memref<1x1x8xf32, #tpu.memory_space<vmem>>, %arg4: memref<1x1x128xf32, #tpu.memory_space<vmem>>, %arg5: memref<1x1x128xf32, #tpu.memory_space<vmem>>, %arg6: memref<1x128x384xf32, #tpu.memory_space<vmem>>, %arg7: memref<1x1x384xf32, #tpu.memory_space<vmem>>, %arg8: memref<1x128x128xf32, #tpu.memory_space<vmem>>, %arg9: memref<1x1x128xf32, #tpu.memory_space<vmem>>, %arg10: memref<1x1x128xf32, #tpu.memory_space<vmem>>, %arg11: memref<1x1x128xf32, #tpu.memory_space<vmem>>, %arg12: memref<1x128x128xf32, #tpu.memory_space<vmem>>, %arg13: memref<1x1x128xf32, #tpu.memory_space<vmem>>, %arg14: memref<1x128x128xf32, #tpu.memory_space<vmem>>, %arg15: memref<1x1x128xf32, #tpu.memory_space<vmem>>, %arg16: memref<1x128xf32, #tpu.memory_space<vmem>>, %arg17: memref<1x128xf32, #tpu.memory_space<vmem>>, %arg18: memref<1x8x128xf32, #tpu.memory_space<vmem>>, %arg19: memref<1x8x128xf32, #tpu.memory_space<vmem>>) attributes {dimension_semantics = [#tpu.dimension_semantics<parallel>, #tpu.dimension_semantics<arbitrary>], iteration_bounds = array<i64: 2, 2>, scalar_prefetch = 0 : i64, scratch_operands = 1 : i64, tpu.core_type = #tpu.core_type<tc>, window_params = [{transform_indices = @transform_0, window_bounds = array<i64: 1, 8, 128>}, {transform_indices = @transform_1, window_bounds = array<i64: 1, 1, 8>}, {transform_indices = @transform_2, window_bounds = array<i64: 1, 1, 128>}, {transform_indices = @transform_3, window_bounds = array<i64: 1, 1, 128>}, {transform_indices = @transform_4, window_bounds = array<i64: 1, 128, 384>}, {transform_indices = @transform_5, window_bounds = array<i64: 1, 1, 384>}, {transform_indices = @transform_6, window_bounds = array<i64: 1, 128, 128>}, {transform_indices = @transform_7, window_bounds = array<i64: 1, 1, 128>}, {transform_indices = @transform_8, window_bounds = array<i64: 1, 1, 128>}, {transform_indices = @transform_9, window_bounds = array<i64: 1, 1, 128>}, {transform_indices = @transform_10, window_bounds = array<i64: 1, 128, 128>}, {transform_indices = @transform_11, window_bounds = array<i64: 1, 1, 128>}, {transform_indices = @transform_12, window_bounds = array<i64: 1, 128, 128>}, {transform_indices = @transform_13, window_bounds = array<i64: 1, 1, 128>}, {pipeline_mode = #tpu.pipeline_mode<synchronous>, transform_indices = @transform_14, window_bounds = array<i64: 1, 128>}, {pipeline_mode = #tpu.pipeline_mode<synchronous>, transform_indices = @transform_15, window_bounds = array<i64: 1, 128>}, {transform_indices = @transform_16, window_bounds = array<i64: 1, 8, 128>}]} {
    %c0_i32 = arith.constant 0 : i32
    %0 = arith.cmpi eq, %arg1, %c0_i32 : i32
    %1 = arith.extui %0 : i1 to i32
    %c0_i32_0 = arith.constant 0 : i32
    %2 = arith.cmpi ne, %1, %c0_i32_0 : i32
    scf.if %2 {
      %c0_67 = arith.constant 0 : index
      %c0_68 = arith.constant 0 : index
      %c0_69 = arith.constant 0 : index
      %133 = vector.load %arg2[%c0_67, %c0_68, %c0_69] : memref<1x8x128xf32, #tpu.memory_space<vmem>>, vector<1x8x128xf32>
      %c0_70 = arith.constant 0 : index
      %c0_71 = arith.constant 0 : index
      %c0_72 = arith.constant 0 : index
      %134 = vector.load %arg19[%c0_70, %c0_71, %c0_72] : memref<1x8x128xf32, #tpu.memory_space<vmem>>, vector<1x8x128xf32>
      tpu.vector_store %arg19[%c0_70, %c0_71, %c0_72], %133 {strides = array<i32>} : memref<1x8x128xf32, #tpu.memory_space<vmem>>, vector<1x8x128xf32>,
    } else {
    }
    %c0 = arith.constant 0 : index
    %c0_1 = arith.constant 0 : index
    %c0_2 = arith.constant 0 : index
    %3 = vector.load %arg19[%c0, %c0_1, %c0_2] : memref<1x8x128xf32, #tpu.memory_space<vmem>>, vector<1x8x128xf32>
    %4 = vector.shape_cast %3 : vector<1x8x128xf32> to vector<8x128xf32>
    %c0_3 = arith.constant 0 : index
    %c0_4 = arith.constant 0 : index
    %c0_5 = arith.constant 0 : index
    %5 = vector.load %arg3[%c0_3, %c0_4, %c0_5] : memref<1x1x8xf32, #tpu.memory_space<vmem>>, vector<1x1x8xf32>
    %cst = arith.constant 5.000000e-01 : f32
    %6 = vector.broadcast %cst : f32 to vector<1x1x8xf32>
    %7 = arith.cmpf olt, %5, %6 : vector<1x1x8xf32>
    %8 = tpu.iota {dimensions = array<i32: 1>} : vector<1x128xi32>
    %c32_i32 = arith.constant 32 : i32
    %9 = vector.broadcast %c32_i32 : i32 to vector<1x128xi32>
    %10 = arith.cmpi slt, %8, %9 : vector<1x128xi32>
    %11 = arith.extui %10 : vector<1x128xi1> to vector<1x128xi32>
    %12 = arith.sitofp %11 : vector<1x128xi32> to vector<1x128xf32>
    %c0_6 = arith.constant 0 : index
    %c0_7 = arith.constant 0 : index
    %c0_8 = arith.constant 0 : index
    %13 = vector.load %arg4[%c0_6, %c0_7, %c0_8] : memref<1x1x128xf32, #tpu.memory_space<vmem>>, vector<1x1x128xf32>
    %14 = vector.shape_cast %13 : vector<1x1x128xf32> to vector<1x128xf32>
    %c0_9 = arith.constant 0 : index
    %c0_10 = arith.constant 0 : index
    %c0_11 = arith.constant 0 : index
    %15 = vector.load %arg5[%c0_9, %c0_10, %c0_11] : memref<1x1x128xf32, #tpu.memory_space<vmem>>, vector<1x1x128xf32>
    %16 = vector.shape_cast %15 : vector<1x1x128xf32> to vector<1x128xf32>
    %cst_12 = arith.constant dense<0.000000e+00> : vector<8xf32>
    %17 = vector.multi_reduction <add>, %4, %cst_12 [1] : vector<8x128xf32> to vector<8xf32>
    %18 = vector.shape_cast %17 : vector<8xf32> to vector<8x1xf32>
    %cst_13 = arith.constant 3.125000e-02 : f32
    %19 = vector.broadcast %cst_13 : f32 to vector<8x1xf32>
    %20 = arith.mulf %18, %19 : vector<8x1xf32>
    %21 = vector.broadcast %20 : vector<8x1xf32> to vector<8x128xf32>
    %22 = arith.subf %4, %21 : vector<8x128xf32>
    %23 = vector.broadcast %12 : vector<1x128xf32> to vector<8x128xf32>
    %24 = arith.mulf %22, %23 : vector<8x128xf32>
    %25 = arith.mulf %24, %24 : vector<8x128xf32>
    %cst_14 = arith.constant dense<0.000000e+00> : vector<8xf32>
    %26 = vector.multi_reduction <add>, %25, %cst_14 [1] : vector<8x128xf32> to vector<8xf32>
    %27 = vector.shape_cast %26 : vector<8xf32> to vector<8x1xf32>
    %cst_15 = arith.constant 0.0322580636 : f32
    %28 = vector.broadcast %cst_15 : f32 to vector<8x1xf32>
    %29 = arith.mulf %27, %28 : vector<8x1xf32>
    %30 = vector.broadcast %20 : vector<8x1xf32> to vector<8x128xf32>
    %31 = arith.subf %4, %30 : vector<8x128xf32>
    %32 = vector.broadcast %14 : vector<1x128xf32> to vector<8x128xf32>
    %33 = arith.mulf %32, %31 : vector<8x128xf32>
    %34 = math.sqrt %29 : vector<8x1xf32>
    %cst_16 = arith.constant 9.99999997E-7 : f32
    %35 = vector.broadcast %cst_16 : f32 to vector<8x1xf32>
    %36 = arith.addf %34, %35 : vector<8x1xf32>
    %37 = vector.broadcast %36 : vector<8x1xf32> to vector<8x128xf32>
    %38 = arith.divf %33, %37 : vector<8x128xf32>
    %39 = vector.broadcast %16 : vector<1x128xf32> to vector<8x128xf32>
    %40 = arith.addf %38, %39 : vector<8x128xf32>
    %c0_17 = arith.constant 0 : index
    %c0_18 = arith.constant 0 : index
    %c0_19 = arith.constant 0 : index
    %41 = vector.load %arg6[%c0_17, %c0_18, %c0_19] : memref<1x128x384xf32, #tpu.memory_space<vmem>>, vector<1x128x384xf32>
    %42 = vector.shape_cast %41 : vector<1x128x384xf32> to vector<128x384xf32>
    %cst_20 = arith.constant dense<0.000000e+00> : vector<8x384xf32>
    %43 = tpu.matmul %40, %42, %cst_20 {dimension_numbers = #tpu.dot_dimension_numbers<[1], [0], [0], [1], [0, 0, 1, 1], [], []>} : vector<8x128xf32>, vector<128x384xf32>, vector<8x384xf32> -> vector<8x384xf32>
    %c0_21 = arith.constant 0 : index
    %c0_22 = arith.constant 0 : index
    %c0_23 = arith.constant 0 : index
    %44 = vector.load %arg7[%c0_21, %c0_22, %c0_23] : memref<1x1x384xf32, #tpu.memory_space<vmem>>, vector<1x1x384xf32>
    %45 = vector.shape_cast %44 : vector<1x1x384xf32> to vector<1x384xf32>
    %46 = vector.broadcast %45 : vector<1x384xf32> to vector<8x384xf32>
    %47 = arith.addf %43, %46 : vector<8x384xf32>
    %48 = vector.extract_strided_slice %47 {offsets = [0, 0], sizes = [8, 128], strides = [1, 1]} : vector<8x384xf32> to vector<8x128xf32>
    %49 = vector.extract_strided_slice %47 {offsets = [0, 128], sizes = [8, 128], strides = [1, 1]} : vector<8x384xf32> to vector<8x128xf32>
    %50 = vector.extract_strided_slice %47 {offsets = [0, 256], sizes = [8, 128], strides = [1, 1]} : vector<8x384xf32> to vector<8x128xf32>
    %51 = vector.shape_cast %48 : vector<8x128xf32> to vector<8x4x32xf32>
    %52 = vector.shape_cast %49 : vector<8x128xf32> to vector<8x4x32xf32>
    %53 = vector.shape_cast %50 : vector<8x128xf32> to vector<8x4x32xf32>
    "tpu.trace_start"() <{level = 10 : i32, message = "qhd,khd->hqk"}> : () -> ()
    %cst_24 = arith.constant dense<0.000000e+00> : vector<4x8x8xf32>
    %54 = tpu.matmul %51, %52, %cst_24 {dimension_numbers = #tpu.dot_dimension_numbers<[2], [2], [0], [0], [0, 1, 0, 0, 1, 0], [1], [1]>} : vector<8x4x32xf32>, vector<8x4x32xf32>, vector<4x8x8xf32> -> vector<4x8x8xf32>
    "tpu.trace_stop"() : () -> ()
    %cst_25 = arith.constant 0.353553385 : f32
    %55 = vector.broadcast %cst_25 : f32 to vector<4x8x8xf32>
    %56 = arith.mulf %54, %55 : vector<4x8x8xf32>
    %57 = vector.shape_cast %7 : vector<1x1x8xi1> to vector<1x8xi1>
    %cst_26 = arith.constant -1.000000e+09 : f32
    %58 = vector.shape_cast %57 : vector<1x8xi1> to vector<1x1x8xi1>
    %59 = vector.broadcast %58 : vector<1x1x8xi1> to vector<4x8x8xi1>
    %60 = vector.broadcast %cst_26 : f32 to vector<4x8x8xf32>
    %61 = arith.select %59, %60, %56 : vector<4x8x8xi1>, vector<4x8x8xf32>
    %cst_27 = arith.constant dense<0xFF800000> : vector<4x8xf32>
    %62 = vector.multi_reduction <maximumf>, %61, %cst_27 [2] : vector<4x8x8xf32> to vector<4x8xf32>
    %63 = vector.shape_cast %62 : vector<4x8xf32> to vector<4x8x1xf32>
    %64 = vector.broadcast %63 : vector<4x8x1xf32> to vector<4x8x8xf32>
    %65 = arith.subf %61, %64 : vector<4x8x8xf32>
    %66 = math.exp %65 : vector<4x8x8xf32>
    %cst_28 = arith.constant dense<0.000000e+00> : vector<4x8xf32>
    %67 = vector.multi_reduction <add>, %66, %cst_28 [2] : vector<4x8x8xf32> to vector<4x8xf32>
    %68 = vector.shape_cast %67 : vector<4x8xf32> to vector<4x8x1xf32>
    %69 = tpu.reciprocal %68 {approx = true} : vector<4x8x1xf32> -> vector<4x8x1xf32>
    %70 = vector.broadcast %69 : vector<4x8x1xf32> to vector<4x8x8xf32>
    %71 = arith.mulf %66, %70 : vector<4x8x8xf32>
    "tpu.trace_start"() <{level = 10 : i32, message = "hqk,khd->qhd"}> : () -> ()
    %cst_29 = arith.constant dense<0.000000e+00> : vector<4x32x8xf32>
    %72 = tpu.matmul %53, %71, %cst_29 {dimension_numbers = #tpu.dot_dimension_numbers<[0], [2], [2], [1], [0, 1, 0, 2, 1, 1], [1], [0]>} : vector<8x4x32xf32>, vector<4x8x8xf32>, vector<4x32x8xf32> -> vector<4x32x8xf32>
    %73 = tpu.transpose %72, [2, 0, 1] : vector<4x32x8xf32> -> vector<8x4x32xf32>
    "tpu.trace_stop"() : () -> ()
    %74 = vector.shape_cast %73 : vector<8x4x32xf32> to vector<8x128xf32>
    %c0_30 = arith.constant 0 : index
    %c0_31 = arith.constant 0 : index
    %c0_32 = arith.constant 0 : index
    %75 = vector.load %arg8[%c0_30, %c0_31, %c0_32] : memref<1x128x128xf32, #tpu.memory_space<vmem>>, vector<1x128x128xf32>
    %76 = vector.shape_cast %75 : vector<1x128x128xf32> to vector<128x128xf32>
    %cst_33 = arith.constant dense<0.000000e+00> : vector<8x128xf32>
    %77 = tpu.matmul %74, %76, %cst_33 {dimension_numbers = #tpu.dot_dimension_numbers<[1], [0], [0], [1], [0, 0, 1, 1], [], []>} : vector<8x128xf32>, vector<128x128xf32>, vector<8x128xf32> -> vector<8x128xf32>
    %c0_34 = arith.constant 0 : index
    %c0_35 = arith.constant 0 : index
    %c0_36 = arith.constant 0 : index
    %78 = vector.load %arg9[%c0_34, %c0_35, %c0_36] : memref<1x1x128xf32, #tpu.memory_space<vmem>>, vector<1x1x128xf32>
    %79 = vector.shape_cast %78 : vector<1x1x128xf32> to vector<1x128xf32>
    %80 = vector.broadcast %79 : vector<1x128xf32> to vector<8x128xf32>
    %81 = arith.addf %77, %80 : vector<8x128xf32>
    %82 = arith.addf %4, %81 : vector<8x128xf32>
    %c0_37 = arith.constant 0 : index
    %c0_38 = arith.constant 0 : index
    %c0_39 = arith.constant 0 : index
    %83 = vector.load %arg10[%c0_37, %c0_38, %c0_39] : memref<1x1x128xf32, #tpu.memory_space<vmem>>, vector<1x1x128xf32>
    %84 = vector.shape_cast %83 : vector<1x1x128xf32> to vector<1x128xf32>
    %c0_40 = arith.constant 0 : index
    %c0_41 = arith.constant 0 : index
    %c0_42 = arith.constant 0 : index
    %85 = vector.load %arg11[%c0_40, %c0_41, %c0_42] : memref<1x1x128xf32, #tpu.memory_space<vmem>>, vector<1x1x128xf32>
    %86 = vector.shape_cast %85 : vector<1x1x128xf32> to vector<1x128xf32>
    %cst_43 = arith.constant dense<0.000000e+00> : vector<8xf32>
    %87 = vector.multi_reduction <add>, %82, %cst_43 [1] : vector<8x128xf32> to vector<8xf32>
    %88 = vector.shape_cast %87 : vector<8xf32> to vector<8x1xf32>
    %cst_44 = arith.constant 3.125000e-02 : f32
    %89 = vector.broadcast %cst_44 : f32 to vector<8x1xf32>
    %90 = arith.mulf %88, %89 : vector<8x1xf32>
    %91 = vector.broadcast %90 : vector<8x1xf32> to vector<8x128xf32>
    %92 = arith.subf %82, %91 : vector<8x128xf32>
    %93 = vector.broadcast %12 : vector<1x128xf32> to vector<8x128xf32>
    %94 = arith.mulf %92, %93 : vector<8x128xf32>
    %95 = arith.mulf %94, %94 : vector<8x128xf32>
    %cst_45 = arith.constant dense<0.000000e+00> : vector<8xf32>
    %96 = vector.multi_reduction <add>, %95, %cst_45 [1] : vector<8x128xf32> to vector<8xf32>
    %97 = vector.shape_cast %96 : vector<8xf32> to vector<8x1xf32>
    %cst_46 = arith.constant 0.0322580636 : f32
    %98 = vector.broadcast %cst_46 : f32 to vector<8x1xf32>
    %99 = arith.mulf %97, %98 : vector<8x1xf32>
    %100 = vector.broadcast %90 : vector<8x1xf32> to vector<8x128xf32>
    %101 = arith.subf %82, %100 : vector<8x128xf32>
    %102 = vector.broadcast %84 : vector<1x128xf32> to vector<8x128xf32>
    %103 = arith.mulf %102, %101 : vector<8x128xf32>
    %104 = math.sqrt %99 : vector<8x1xf32>
    %cst_47 = arith.constant 9.99999997E-7 : f32
    %105 = vector.broadcast %cst_47 : f32 to vector<8x1xf32>
    %106 = arith.addf %104, %105 : vector<8x1xf32>
    %107 = vector.broadcast %106 : vector<8x1xf32> to vector<8x128xf32>
    %108 = arith.divf %103, %107 : vector<8x128xf32>
    %109 = vector.broadcast %86 : vector<1x128xf32> to vector<8x128xf32>
    %110 = arith.addf %108, %109 : vector<8x128xf32>
    %c0_48 = arith.constant 0 : index
    %c0_49 = arith.constant 0 : index
    %c0_50 = arith.constant 0 : index
    %111 = vector.load %arg12[%c0_48, %c0_49, %c0_50] : memref<1x128x128xf32, #tpu.memory_space<vmem>>, vector<1x128x128xf32>
    %112 = vector.shape_cast %111 : vector<1x128x128xf32> to vector<128x128xf32>
    %cst_51 = arith.constant dense<0.000000e+00> : vector<8x128xf32>
    %113 = tpu.matmul %110, %112, %cst_51 {dimension_numbers = #tpu.dot_dimension_numbers<[1], [0], [0], [1], [0, 0, 1, 1], [], []>} : vector<8x128xf32>, vector<128x128xf32>, vector<8x128xf32> -> vector<8x128xf32>
    %c0_52 = arith.constant 0 : index
    %c0_53 = arith.constant 0 : index
    %c0_54 = arith.constant 0 : index
    %114 = vector.load %arg13[%c0_52, %c0_53, %c0_54] : memref<1x1x128xf32, #tpu.memory_space<vmem>>, vector<1x1x128xf32>
    %115 = vector.shape_cast %114 : vector<1x1x128xf32> to vector<1x128xf32>
    %116 = vector.broadcast %115 : vector<1x128xf32> to vector<8x128xf32>
    %117 = arith.addf %113, %116 : vector<8x128xf32>
    %cst_55 = arith.constant 0.000000e+00 : f32
    %118 = vector.broadcast %cst_55 : f32 to vector<8x128xf32>
    %119 = arith.maximumf %117, %118 : vector<8x128xf32>
    %c0_56 = arith.constant 0 : index
    %c0_57 = arith.constant 0 : index
    %c0_58 = arith.constant 0 : index
    %120 = vector.load %arg14[%c0_56, %c0_57, %c0_58] : memref<1x128x128xf32, #tpu.memory_space<vmem>>, vector<1x128x128xf32>
    %121 = vector.shape_cast %120 : vector<1x128x128xf32> to vector<128x128xf32>
    %cst_59 = arith.constant dense<0.000000e+00> : vector<8x128xf32>
    %122 = tpu.matmul %119, %121, %cst_59 {dimension_numbers = #tpu.dot_dimension_numbers<[1], [0], [0], [1], [0, 0, 1, 1], [], []>} : vector<8x128xf32>, vector<128x128xf32>, vector<8x128xf32> -> vector<8x128xf32>
    %c0_60 = arith.constant 0 : index
    %c0_61 = arith.constant 0 : index
    %c0_62 = arith.constant 0 : index
    %123 = vector.load %arg15[%c0_60, %c0_61, %c0_62] : memref<1x1x128xf32, #tpu.memory_space<vmem>>, vector<1x1x128xf32>
    %124 = vector.shape_cast %123 : vector<1x1x128xf32> to vector<1x128xf32>
    %125 = vector.broadcast %124 : vector<1x128xf32> to vector<8x128xf32>
    %126 = arith.addf %122, %125 : vector<8x128xf32>
    %127 = arith.addf %82, %126 : vector<8x128xf32>
    %128 = vector.shape_cast %127 : vector<8x128xf32> to vector<1x8x128xf32>
    %c0_63 = arith.constant 0 : index
    %c0_64 = arith.constant 0 : index
    %c0_65 = arith.constant 0 : index
    %129 = vector.load %arg19[%c0_63, %c0_64, %c0_65] : memref<1x8x128xf32, #tpu.memory_space<vmem>>, vector<1x8x128xf32>
    tpu.vector_store %arg19[%c0_63, %c0_64, %c0_65], %128 {strides = array<i32>} : memref<1x8x128xf32, #tpu.memory_space<vmem>>, vector<1x8x128xf32>,
    %c1_i32 = arith.constant 1 : i32
    %130 = arith.cmpi eq, %arg1, %c1_i32 : i32
    %131 = arith.extui %130 : i1 to i32
    %c0_i32_66 = arith.constant 0 : i32
    %132 = arith.cmpi ne, %131, %c0_i32_66 : i32
    scf.if %132 {
      %c0_67 = arith.constant 0 : index
      %c0_68 = arith.constant 0 : index
      %133 = vector.load %arg16[%c0_67, %c0_68] : memref<1x128xf32, #tpu.memory_space<vmem>>, vector<1x128xf32>
      %c0_69 = arith.constant 0 : index
      %c0_70 = arith.constant 0 : index
      %134 = vector.load %arg17[%c0_69, %c0_70] : memref<1x128xf32, #tpu.memory_space<vmem>>, vector<1x128xf32>
      %cst_71 = arith.constant dense<0.000000e+00> : vector<8xf32>
      %135 = vector.multi_reduction <add>, %127, %cst_71 [1] : vector<8x128xf32> to vector<8xf32>
      %136 = vector.shape_cast %135 : vector<8xf32> to vector<8x1xf32>
      %cst_72 = arith.constant 3.125000e-02 : f32
      %137 = vector.broadcast %cst_72 : f32 to vector<8x1xf32>
      %138 = arith.mulf %136, %137 : vector<8x1xf32>
      %139 = vector.broadcast %138 : vector<8x1xf32> to vector<8x128xf32>
      %140 = arith.subf %127, %139 : vector<8x128xf32>
      %141 = vector.broadcast %12 : vector<1x128xf32> to vector<8x128xf32>
      %142 = arith.mulf %140, %141 : vector<8x128xf32>
      %143 = arith.mulf %142, %142 : vector<8x128xf32>
      %cst_73 = arith.constant dense<0.000000e+00> : vector<8xf32>
      %144 = vector.multi_reduction <add>, %143, %cst_73 [1] : vector<8x128xf32> to vector<8xf32>
      %145 = vector.shape_cast %144 : vector<8xf32> to vector<8x1xf32>
      %cst_74 = arith.constant 0.0322580636 : f32
      %146 = vector.broadcast %cst_74 : f32 to vector<8x1xf32>
      %147 = arith.mulf %145, %146 : vector<8x1xf32>
      %148 = vector.broadcast %138 : vector<8x1xf32> to vector<8x128xf32>
      %149 = arith.subf %127, %148 : vector<8x128xf32>
      %150 = vector.broadcast %133 : vector<1x128xf32> to vector<8x128xf32>
      %151 = arith.mulf %150, %149 : vector<8x128xf32>
      %152 = math.sqrt %147 : vector<8x1xf32>
      %cst_75 = arith.constant 9.99999997E-7 : f32
      %153 = vector.broadcast %cst_75 : f32 to vector<8x1xf32>
      %154 = arith.addf %152, %153 : vector<8x1xf32>
      %155 = vector.broadcast %154 : vector<8x1xf32> to vector<8x128xf32>
      %156 = arith.divf %151, %155 : vector<8x128xf32>
      %157 = vector.broadcast %134 : vector<1x128xf32> to vector<8x128xf32>
      %158 = arith.addf %156, %157 : vector<8x128xf32>
      %159 = vector.shape_cast %158 : vector<8x128xf32> to vector<1x8x128xf32>
      %c0_76 = arith.constant 0 : index
      %c0_77 = arith.constant 0 : index
      %c0_78 = arith.constant 0 : index
      %160 = vector.load %arg18[%c0_76, %c0_77, %c0_78] : memref<1x8x128xf32, #tpu.memory_space<vmem>>, vector<1x8x128xf32>
      tpu.vector_store %arg18[%c0_76, %c0_77, %c0_78], %159 {strides = array<i32>} : memref<1x8x128xf32, #tpu.memory_space<vmem>>, vector<1x8x128xf32>,
    } else {
    }
    return
  }
  func.func @transform_0(%arg0: i32, %arg1: i32) -> (i32, i32, i32) {
    %c0_i32 = arith.constant 0 : i32
    %c0_i32_0 = arith.constant 0 : i32
    %c0_i32_1 = arith.constant 0 : i32
    return %arg0, %c0_i32, %c0_i32_0 : i32, i32, i32
  }
  func.func @transform_1(%arg0: i32, %arg1: i32) -> (i32, i32, i32) {
    %c0_i32 = arith.constant 0 : i32
    %c0_i32_0 = arith.constant 0 : i32
    %c0_i32_1 = arith.constant 0 : i32
    return %arg0, %c0_i32, %c0_i32_0 : i32, i32, i32
  }
  func.func @transform_2(%arg0: i32, %arg1: i32) -> (i32, i32, i32) {
    %c0_i32 = arith.constant 0 : i32
    %c0_i32_0 = arith.constant 0 : i32
    %c0_i32_1 = arith.constant 0 : i32
    return %arg1, %c0_i32, %c0_i32_0 : i32, i32, i32
  }
  func.func @transform_3(%arg0: i32, %arg1: i32) -> (i32, i32, i32) {
    %c0_i32 = arith.constant 0 : i32
    %c0_i32_0 = arith.constant 0 : i32
    %c0_i32_1 = arith.constant 0 : i32
    return %arg1, %c0_i32, %c0_i32_0 : i32, i32, i32
  }
  func.func @transform_4(%arg0: i32, %arg1: i32) -> (i32, i32, i32) {
    %c0_i32 = arith.constant 0 : i32
    %c0_i32_0 = arith.constant 0 : i32
    %c0_i32_1 = arith.constant 0 : i32
    return %arg1, %c0_i32, %c0_i32_0 : i32, i32, i32
  }
  func.func @transform_5(%arg0: i32, %arg1: i32) -> (i32, i32, i32) {
    %c0_i32 = arith.constant 0 : i32
    %c0_i32_0 = arith.constant 0 : i32
    %c0_i32_1 = arith.constant 0 : i32
    return %arg1, %c0_i32, %c0_i32_0 : i32, i32, i32
  }
  func.func @transform_6(%arg0: i32, %arg1: i32) -> (i32, i32, i32) {
    %c0_i32 = arith.constant 0 : i32
    %c0_i32_0 = arith.constant 0 : i32
    %c0_i32_1 = arith.constant 0 : i32
    return %arg1, %c0_i32, %c0_i32_0 : i32, i32, i32
  }
  func.func @transform_7(%arg0: i32, %arg1: i32) -> (i32, i32, i32) {
    %c0_i32 = arith.constant 0 : i32
    %c0_i32_0 = arith.constant 0 : i32
    %c0_i32_1 = arith.constant 0 : i32
    return %arg1, %c0_i32, %c0_i32_0 : i32, i32, i32
  }
  func.func @transform_8(%arg0: i32, %arg1: i32) -> (i32, i32, i32) {
    %c0_i32 = arith.constant 0 : i32
    %c0_i32_0 = arith.constant 0 : i32
    %c0_i32_1 = arith.constant 0 : i32
    return %arg1, %c0_i32, %c0_i32_0 : i32, i32, i32
  }
  func.func @transform_9(%arg0: i32, %arg1: i32) -> (i32, i32, i32) {
    %c0_i32 = arith.constant 0 : i32
    %c0_i32_0 = arith.constant 0 : i32
    %c0_i32_1 = arith.constant 0 : i32
    return %arg1, %c0_i32, %c0_i32_0 : i32, i32, i32
  }
  func.func @transform_10(%arg0: i32, %arg1: i32) -> (i32, i32, i32) {
    %c0_i32 = arith.constant 0 : i32
    %c0_i32_0 = arith.constant 0 : i32
    %c0_i32_1 = arith.constant 0 : i32
    return %arg1, %c0_i32, %c0_i32_0 : i32, i32, i32
  }
  func.func @transform_11(%arg0: i32, %arg1: i32) -> (i32, i32, i32) {
    %c0_i32 = arith.constant 0 : i32
    %c0_i32_0 = arith.constant 0 : i32
    %c0_i32_1 = arith.constant 0 : i32
    return %arg1, %c0_i32, %c0_i32_0 : i32, i32, i32
  }
  func.func @transform_12(%arg0: i32, %arg1: i32) -> (i32, i32, i32) {
    %c0_i32 = arith.constant 0 : i32
    %c0_i32_0 = arith.constant 0 : i32
    %c0_i32_1 = arith.constant 0 : i32
    return %arg1, %c0_i32, %c0_i32_0 : i32, i32, i32
  }
  func.func @transform_13(%arg0: i32, %arg1: i32) -> (i32, i32, i32) {
    %c0_i32 = arith.constant 0 : i32
    %c0_i32_0 = arith.constant 0 : i32
    %c0_i32_1 = arith.constant 0 : i32
    return %arg1, %c0_i32, %c0_i32_0 : i32, i32, i32
  }
  func.func @transform_14(%arg0: i32, %arg1: i32) -> (i32, i32) {
    %c0_i32 = arith.constant 0 : i32
    %c0_i32_0 = arith.constant 0 : i32
    %c0_i32_1 = arith.constant 0 : i32
    return %c0_i32, %c0_i32_0 : i32, i32
  }
  func.func @transform_15(%arg0: i32, %arg1: i32) -> (i32, i32) {
    %c0_i32 = arith.constant 0 : i32
    %c0_i32_0 = arith.constant 0 : i32
    %c0_i32_1 = arith.constant 0 : i32
    return %c0_i32, %c0_i32_0 : i32, i32
  }
  func.func @transform_16(%arg0: i32, %arg1: i32) -> (i32, i32, i32) {
    %c0_i32 = arith.constant 0 : i32
    %c0_i32_0 = arith.constant 0 : i32
    %c0_i32_1 = arith.constant 0 : i32
    return %arg0, %c0_i32, %c0_i32_0 : i32, i32, i32
  }
}

</mosaic_0001>

<llo_original>
// kernel: tpu_custom_call.1
$region0: #{tpu_custom_call.1}
  #allocation0 [shape = 'u32[]', space=smem, size = 0x4, offset = 0x4, fixed_abs, tag = 'smem constant byte address 0x4 - core index']
  #allocation1 [shape = 'u32[72,128]{1,0:T(1,128)}', space=vmem, size = 0x9000, scoped, tag = 'internal scratch']
  #allocation2 [shape = 'f32[1,8,128]{2,1,0:T(8,128)}', space=vmem, size = 0x1000, scoped, tag = 'scratch operand']
  %s0 = inlined_call_operand.hbm [shape: f32[2,8,128], index: 0, kind: input, shape index: {}]
  %s1 = inlined_call_operand.hbm [shape: f32[2,1,8], index: 1, kind: input, shape index: {}]
  %s2 = inlined_call_operand.hbm [shape: f32[2,1,128], index: 2, kind: input, shape index: {}]
  %s3 = inlined_call_operand.vmem [shape: f32[2,1,128], index: 3, kind: input, shape index: {}]
  %s4 = inlined_call_operand.hbm [shape: f32[2,128,384], index: 4, kind: input, shape index: {}]
  %s5 = inlined_call_operand.hbm [shape: f32[2,1,384], index: 5, kind: input, shape index: {}]
  %s6 = inlined_call_operand.hbm [shape: f32[2,128,128], index: 6, kind: input, shape index: {}]
  %s7 = inlined_call_operand.vmem [shape: f32[2,1,128], index: 7, kind: input, shape index: {}]
  %s8 = inlined_call_operand.vmem [shape: f32[2,1,128], index: 8, kind: input, shape index: {}]
  %s9 = inlined_call_operand.vmem [shape: f32[2,1,128], index: 9, kind: input, shape index: {}]
  %s10 = inlined_call_operand.hbm [shape: f32[2,128,128], index: 10, kind: input, shape index: {}]
  %s11 = inlined_call_operand.vmem [shape: f32[2,1,128], index: 11, kind: input, shape index: {}]
  %s12 = inlined_call_operand.hbm [shape: f32[2,128,128], index: 12, kind: input, shape index: {}]
  %s13 = inlined_call_operand.vmem [shape: f32[2,1,128], index: 13, kind: input, shape index: {}]
  %s14 = inlined_call_operand.vmem [shape: f32[1,128], index: 14, kind: input, shape index: {}]
  %s15 = inlined_call_operand.vmem [shape: f32[1,128], index: 15, kind: input, shape index: {}]
  %s16 = inlined_call_operand.hbm [shape: f32[2,8,128], index: 16, kind: output, shape index: {}]
  %s17 = sld [smem:[#allocation0]]
  $region137: #{tpu_custom_call.1} parent=0
    _
  %s19 = ssub.s32 1, %s17
  %s20 = scalar_select 0, %s19, %s17
  $region1: #{tpu_custom_call.1} parent=0
    #allocation3 [shape = 'u8[8192]{0}', space=vmem, size = 0x2000, scoped, tag = 'input window, operand 0']
    #allocation4 [shape = 's32[2]{0}', space=sflag, size = 0x8, scoped, tag = 'scoped memory for tpu_custom_call.1']
    #allocation5 [shape = 's32[2]{0}', space=sflag, size = 0x8, scoped, tag = 'scoped memory for tpu_custom_call.1']
    #allocation6 [shape = 'u8[1024]{0}', space=vmem, size = 0x400, scoped, tag = 'input window, operand 1']
    #allocation7 [shape = 's32[2]{0}', space=sflag, size = 0x8, scoped, tag = 'scoped memory for tpu_custom_call.1']
    #allocation8 [shape = 'u8[1024]{0}', space=vmem, size = 0x400, scoped, tag = 'input window, operand 2']
    #allocation9 [shape = 'u8[393216]{0}', space=vmem, size = 0x60000, scoped, tag = 'input window, operand 4']
    #allocation10 [shape = 's32[2]{0}', space=sflag, size = 0x8, scoped, tag = 'scoped memory for tpu_custom_call.1']
    #allocation11 [shape = 'u8[3072]{0}', space=vmem, size = 0xc00, scoped, tag = 'input window, operand 5']
    #allocation12 [shape = 'u8[131072]{0}', space=vmem, size = 0x20000, scoped, tag = 'input window, operand 6']
    #allocation13 [shape = 's32[2]{0}', space=sflag, size = 0x8, scoped, tag = 'scoped memory for tpu_custom_call.1']
    #allocation14 [shape = 'u8[131072]{0}', space=vmem, size = 0x20000, scoped, tag = 'input window, operand 10']
    #allocation15 [shape = 'u8[131072]{0}', space=vmem, size = 0x20000, scoped, tag = 'input window, operand 12']
    #allocation16 [shape = 's32[2]{0}', space=sflag, size = 0x8, scoped, tag = 'scoped memory for tpu_custom_call.1']
    #allocation17 [shape = 'u8[8192]{0}', space=vmem, size = 0x2000, scoped, tag = 'output window, operand 0']
    %21 = vsyncpa [#allocation4], 0
    %s22 = scalar_lea.sflag [#allocation4], 1
    %23 = vsyncpa %s22, 0
    %24 = vsyncpa [#allocation7], 0
    %s25 = scalar_lea.sflag [#allocation7], 1
    %26 = vsyncpa %s25, 0
    %27 = vsyncpa [#allocation10], 0
    %s28 = scalar_lea.sflag [#allocation10], 1
    %29 = vsyncpa %s28, 0
    %30 = vsyncpa [#allocation13], 0
    %s31 = scalar_lea.sflag [#allocation13], 1
    %32 = vsyncpa %s31, 0
    %33 = vsyncpa [#allocation16], 0
    %s34 = scalar_lea.sflag [#allocation16], 1
    %35 = vsyncpa %s34, 0
    %36 = vsyncpa [#allocation5], 0
    %s37 = scalar_lea.sflag [#allocation5], 1
    %38 = vsyncpa %s37, 0
    loop: start=0, step=1, limit=6
    $region2: #{tpu_custom_call.1} parent=1 // loop_pre_header
      _
    $region3: #{tpu_custom_call.1} parent=1 // loop_header
      %s40 = sphi 0, %s44
      %p41 = scmp.ge.s32.totalorder %s40, 6
      %s47 = sphi 0, %s59
      %s48 = sphi 0, %s55
      %s49 = sphi 0, %s47
      %s50 = sphi 0, %s48
      %s51 = sphi 0, %s49
      %s52 = sphi 0, %s50
      %s62 = sphi 0, %s64
      %s65 = sphi 0, %s62
      %s66 = sphi 0, %s65
      %s82 = sphi 0, %s66
      %s88 = sphi 0, %s90
      %s91 = sphi 0, %s88
      %s92 = sphi 0, %s91
      %s108 = sphi 0, %s92
      %s114 = sphi 0, %s116
      %s117 = sphi 0, %s114
      %s118 = sphi 0, %s117
      %s134 = sphi 0, %s118
      %s140 = sphi 0, %s142
      %s143 = sphi 0, %s140
      %s144 = sphi 0, %s143
      %s160 = sphi 0, %s144
      %s166 = sphi 0, %s168
      %s169 = sphi 0, %s166
      %s170 = sphi 0, %s169
      %s186 = sphi 0, %s170
      %s192 = sphi 0, %s194
      %s195 = sphi 0, %s192
      %s196 = sphi 0, %s195
      %s212 = sphi 0, %s196
      %s218 = sphi 0, %s220
      %s221 = sphi 0, %s218
      %s222 = sphi 0, %s221
      %s238 = sphi 0, %s222
      %s244 = sphi 0, %s246
      %s247 = sphi 0, %s244
      %s248 = sphi 0, %s247
      %s264 = sphi 0, %s248
      %s270 = sphi 0, %s272
      %s273 = sphi 0, %s270
      %s274 = sphi 0, %s273
      %s290 = sphi 0, %s274
      %s296 = sphi 0, %s298
      %s299 = sphi 0, %s296
      %s300 = sphi 0, %s299
      %s316 = sphi 0, %s300
      %s322 = sphi 0, %s324
      %s325 = sphi 0, %s322
      %s326 = sphi 0, %s325
      %s342 = sphi 0, %s326
      %s348 = sphi 0, %s350
      %s351 = sphi 0, %s348
      %s352 = sphi 0, %s351
      %s368 = sphi 0, %s352
      %s374 = sphi 0, %s376
      %s377 = sphi 0, %s374
      %s378 = sphi 0, %s377
      %s394 = sphi 0, %s378
      %s400 = sphi 0, %s402
      %s403 = sphi 0, %s400
      %s404 = sphi 0, %s403
      %s420 = sphi 0, %s404
      %s424 = sphi 0, %s424
      %s426 = sphi 0, %s424
      %s427 = sphi 0, %s426
      %s441 = sphi 0, %s427
      %s445 = sphi 0, %s445
      %s447 = sphi 0, %s445
      %s448 = sphi 0, %s447
      %s462 = sphi 0, %s448
      %s468 = sphi 0, %s470
      %s471 = sphi 0, %s468
      %s472 = sphi 0, %s471
      %s488 = sphi 0, %s472
    $region4: #{tpu_custom_call.1} parent=1 // loop_header_branch
      %43 = sbr.rel (%p41) target = $region8
    $region5: #{tpu_custom_call.1} parent=1 // loop_body
      %s45 = ssub.s32 %s40, 1
      %s46 = ssub.s32 %s40, 2
      %s53 = sadd.s32 1, %s48
      %p54 = scmp.ge.s32.totalorder %s53, 2
      %s55 = scalar_select %p54, 0, %s53
      %s56 = sadd.s32 1, %s47
      %s57 = scalar_select %p54, %s56, %s47
      %p58 = scmp.ge.s32.totalorder %s57, 2
      %s59 = scalar_select %p58, 0, %s57
      %s60 = ssub.s32 %s47, %s59
      %p61 = scmp.eq.s32.totalorder %s60, 0
      %s63 = sadd.s32 %s62, 1
      %s64 = scalar_select %p61, %s62, %s63
      %p67 = pneg %p61
      %p68 = scmp.eq.s32.totalorder %s40, 3
      %p69 = por %p67, %p68
      %p70 = scmp.ne.s32.totalorder %s62, %s65
      %p71 = scmp.eq.s32.totalorder %s40, 0
      %p72 = por %p70, %p71
      %p73 = scmp.ne.s32.totalorder %s62, %s65
      %p74 = scmp.eq.s32.totalorder %s45, 3
      %p75 = por %p73, %p74
      %p76 = scmp.ne.s32.totalorder %s65, %s66
      %p77 = scmp.eq.s32.totalorder %s45, 0
      %p78 = por %p76, %p77
      %p79 = scmp.ne.s32.totalorder %s65, %s66
      %p80 = scmp.eq.s32.totalorder %s46, 3
      %p81 = por %p79, %p80
      %p83 = scmp.ne.s32.totalorder %s66, %s82
      %p84 = scmp.eq.s32.totalorder %s46, 0
      %p85 = por %p83, %p84
      %s86 = ssub.s32 %s47, %s59
      %p87 = scmp.eq.s32.totalorder %s86, 0
      %s89 = sadd.s32 %s88, 1
      %s90 = scalar_select %p87, %s88, %s89
      %p93 = pneg %p87
      %p94 = scmp.eq.s32.totalorder %s40, 3
      %p95 = por %p93, %p94
      %p96 = scmp.ne.s32.totalorder %s88, %s91
      %p97 = scmp.eq.s32.totalorder %s40, 0
      %p98 = por %p96, %p97
      %p99 = scmp.ne.s32.totalorder %s88, %s91
      %p100 = scmp.eq.s32.totalorder %s45, 3
      %p101 = por %p99, %p100
      %p102 = scmp.ne.s32.totalorder %s91, %s92
      %p103 = scmp.eq.s32.totalorder %s45, 0
      %p104 = por %p102, %p103
      %p105 = scmp.ne.s32.totalorder %s91, %s92
      %p106 = scmp.eq.s32.totalorder %s46, 3
      %p107 = por %p105, %p106
      %p109 = scmp.ne.s32.totalorder %s92, %s108
      %p110 = scmp.eq.s32.totalorder %s46, 0
      %p111 = por %p109, %p110
      %s112 = ssub.s32 %s48, %s55
      %p113 = scmp.eq.s32.totalorder %s112, 0
      %s115 = sadd.s32 %s114, 1
      %s116 = scalar_select %p113, %s114, %s115
      %p119 = pneg %p113
      %p120 = scmp.eq.s32.totalorder %s40, 3
      %p121 = por %p119, %p120
      %p122 = scmp.ne.s32.totalorder %s114, %s117
      %p123 = scmp.eq.s32.totalorder %s40, 0
      %p124 = por %p122, %p123
      %p125 = scmp.ne.s32.totalorder %s114, %s117
      %p126 = scmp.eq.s32.totalorder %s45, 3
      %p127 = por %p125, %p126
      %p128 = scmp.ne.s32.totalorder %s117, %s118
      %p129 = scmp.eq.s32.totalorder %s45, 0
      %p130 = por %p128, %p129
      %p131 = scmp.ne.s32.totalorder %s117, %s118
      %p132 = scmp.eq.s32.totalorder %s46, 3
      %p133 = por %p131, %p132
      %p135 = scmp.ne.s32.totalorder %s118, %s134
      %p136 = scmp.eq.s32.totalorder %s46, 0
      %p137 = por %p135, %p136
      %s138 = ssub.s32 %s48, %s55
      %p139 = scmp.eq.s32.totalorder %s138, 0
      %s141 = sadd.s32 %s140, 1
      %s142 = scalar_select %p139, %s140, %s141
      %p145 = pneg %p139
      %p146 = scmp.eq.s32.totalorder %s40, 3
      %p147 = por %p145, %p146
      %p148 = scmp.ne.s32.totalorder %s140, %s143
      %p149 = scmp.eq.s32.totalorder %s40, 0
      %p150 = por %p148, %p149
      %p151 = scmp.ne.s32.totalorder %s140, %s143
      %p152 = scmp.eq.s32.totalorder %s45, 3
      %p153 = por %p151, %p152
      %p154 = scmp.ne.s32.totalorder %s143, %s144
      %p155 = scmp.eq.s32.totalorder %s45, 0
      %p156 = por %p154, %p155
      %p157 = scmp.ne.s32.totalorder %s143, %s144
      %p158 = scmp.eq.s32.totalorder %s46, 3
      %p159 = por %p157, %p158
      %p161 = scmp.ne.s32.totalorder %s144, %s160
      %p162 = scmp.eq.s32.totalorder %s46, 0
      %p163 = por %p161, %p162
      %s164 = ssub.s32 %s48, %s55
      %p165 = scmp.eq.s32.totalorder %s164, 0
      %s167 = sadd.s32 %s166, 1
      %s168 = scalar_select %p165, %s166, %s167
      %p171 = pneg %p165
      %p172 = scmp.eq.s32.totalorder %s40, 3
      %p173 = por %p171, %p172
      %p174 = scmp.ne.s32.totalorder %s166, %s169
      %p175 = scmp.eq.s32.totalorder %s40, 0
      %p176 = por %p174, %p175
      %p177 = scmp.ne.s32.totalorder %s166, %s169
      %p178 = scmp.eq.s32.totalorder %s45, 3
      %p179 = por %p177, %p178
      %p180 = scmp.ne.s32.totalorder %s169, %s170
      %p181 = scmp.eq.s32.totalorder %s45, 0
      %p182 = por %p180, %p181
      %p183 = scmp.ne.s32.totalorder %s169, %s170
      %p184 = scmp.eq.s32.totalorder %s46, 3
      %p185 = por %p183, %p184
      %p187 = scmp.ne.s32.totalorder %s170, %s186
      %p188 = scmp.eq.s32.totalorder %s46, 0
      %p189 = por %p187, %p188
      %s190 = ssub.s32 %s48, %s55
      %p191 = scmp.eq.s32.totalorder %s190, 0
      %s193 = sadd.s32 %s192, 1
      %s194 = scalar_select %p191, %s192, %s193
      %p197 = pneg %p191
      %p198 = scmp.eq.s32.totalorder %s40, 3
      %p199 = por %p197, %p198
      %p200 = scmp.ne.s32.totalorder %s192, %s195
      %p201 = scmp.eq.s32.totalorder %s40, 0
      %p202 = por %p200, %p201
      %p203 = scmp.ne.s32.totalorder %s192, %s195
      %p204 = scmp.eq.s32.totalorder %s45, 3
      %p205 = por %p203, %p204
      %p206 = scmp.ne.s32.totalorder %s195, %s196
      %p207 = scmp.eq.s32.totalorder %s45, 0
      %p208 = por %p206, %p207
      %p209 = scmp.ne.s32.totalorder %s195, %s196
      %p210 = scmp.eq.s32.totalorder %s46, 3
      %p211 = por %p209, %p210
      %p213 = scmp.ne.s32.totalorder %s196, %s212
      %p214 = scmp.eq.s32.totalorder %s46, 0
      %p215 = por %p213, %p214
      %s216 = ssub.s32 %s48, %s55
      %p217 = scmp.eq.s32.totalorder %s216, 0
      %s219 = sadd.s32 %s218, 1
      %s220 = scalar_select %p217, %s218, %s219
      %p223 = pneg %p217
      %p224 = scmp.eq.s32.totalorder %s40, 3
      %p225 = por %p223, %p224
      %p226 = scmp.ne.s32.totalorder %s218, %s221
      %p227 = scmp.eq.s32.totalorder %s40, 0
      %p228 = por %p226, %p227
      %p229 = scmp.ne.s32.totalorder %s218, %s221
      %p230 = scmp.eq.s32.totalorder %s45, 3
      %p231 = por %p229, %p230
      %p232 = scmp.ne.s32.totalorder %s221, %s222
      %p233 = scmp.eq.s32.totalorder %s45, 0
      %p234 = por %p232, %p233
      %p235 = scmp.ne.s32.totalorder %s221, %s222
      %p236 = scmp.eq.s32.totalorder %s46, 3
      %p237 = por %p235, %p236
      %p239 = scmp.ne.s32.totalorder %s222, %s238
      %p240 = scmp.eq.s32.totalorder %s46, 0
      %p241 = por %p239, %p240
      %s242 = ssub.s32 %s48, %s55
      %p243 = scmp.eq.s32.totalorder %s242, 0
      %s245 = sadd.s32 %s244, 1
      %s246 = scalar_select %p243, %s244, %s245
      %p249 = pneg %p243
      %p250 = scmp.eq.s32.totalorder %s40, 3
      %p251 = por %p249, %p250
      %p252 = scmp.ne.s32.totalorder %s244, %s247
      %p253 = scmp.eq.s32.totalorder %s40, 0
      %p254 = por %p252, %p253
      %p255 = scmp.ne.s32.totalorder %s244, %s247
      %p256 = scmp.eq.s32.totalorder %s45, 3
      %p257 = por %p255, %p256
      %p258 = scmp.ne.s32.totalorder %s247, %s248
      %p259 = scmp.eq.s32.totalorder %s45, 0
      %p260 = por %p258, %p259
      %p261 = scmp.ne.s32.totalorder %s247, %s248
      %p262 = scmp.eq.s32.totalorder %s46, 3
      %p263 = por %p261, %p262
      %p265 = scmp.ne.s32.totalorder %s248, %s264
      %p266 = scmp.eq.s32.totalorder %s46, 0
      %p267 = por %p265, %p266
      %s268 = ssub.s32 %s48, %s55
      %p269 = scmp.eq.s32.totalorder %s268, 0
      %s271 = sadd.s32 %s270, 1
      %s272 = scalar_select %p269, %s270, %s271
      %p275 = pneg %p269
      %p276 = scmp.eq.s32.totalorder %s40, 3
      %p277 = por %p275, %p276
      %p278 = scmp.ne.s32.totalorder %s270, %s273
      %p279 = scmp.eq.s32.totalorder %s40, 0
      %p280 = por %p278, %p279
      %p281 = scmp.ne.s32.totalorder %s270, %s273
      %p282 = scmp.eq.s32.totalorder %s45, 3
      %p283 = por %p281, %p282
      %p284 = scmp.ne.s32.totalorder %s273, %s274
      %p285 = scmp.eq.s32.totalorder %s45, 0
      %p286 = por %p284, %p285
      %p287 = scmp.ne.s32.totalorder %s273, %s274
      %p288 = scmp.eq.s32.totalorder %s46, 3
      %p289 = por %p287, %p288
      %p291 = scmp.ne.s32.totalorder %s274, %s290
      %p292 = scmp.eq.s32.totalorder %s46, 0
      %p293 = por %p291, %p292
      %s294 = ssub.s32 %s48, %s55
      %p295 = scmp.eq.s32.totalorder %s294, 0
      %s297 = sadd.s32 %s296, 1
      %s298 = scalar_select %p295, %s296, %s297
      %p301 = pneg %p295
      %p302 = scmp.eq.s32.totalorder %s40, 3
      %p303 = por %p301, %p302
      %p304 = scmp.ne.s32.totalorder %s296, %s299
      %p305 = scmp.eq.s32.totalorder %s40, 0
      %p306 = por %p304, %p305
      %p307 = scmp.ne.s32.totalorder %s296, %s299
      %p308 = scmp.eq.s32.totalorder %s45, 3
      %p309 = por %p307, %p308
      %p310 = scmp.ne.s32.totalorder %s299, %s300
      %p311 = scmp.eq.s32.totalorder %s45, 0
      %p312 = por %p310, %p311
      %p313 = scmp.ne.s32.totalorder %s299, %s300
      %p314 = scmp.eq.s32.totalorder %s46, 3
      %p315 = por %p313, %p314
      %p317 = scmp.ne.s32.totalorder %s300, %s316
      %p318 = scmp.eq.s32.totalorder %s46, 0
      %p319 = por %p317, %p318
      %s320 = ssub.s32 %s48, %s55
      %p321 = scmp.eq.s32.totalorder %s320, 0
      %s323 = sadd.s32 %s322, 1
      %s324 = scalar_select %p321, %s322, %s323
      %p327 = pneg %p321
      %p328 = scmp.eq.s32.totalorder %s40, 3
      %p329 = por %p327, %p328
      %p330 = scmp.ne.s32.totalorder %s322, %s325
      %p331 = scmp.eq.s32.totalorder %s40, 0
      %p332 = por %p330, %p331
      %p333 = scmp.ne.s32.totalorder %s322, %s325
      %p334 = scmp.eq.s32.totalorder %s45, 3
      %p335 = por %p333, %p334
      %p336 = scmp.ne.s32.totalorder %s325, %s326
      %p337 = scmp.eq.s32.totalorder %s45, 0
      %p338 = por %p336, %p337
      %p339 = scmp.ne.s32.totalorder %s325, %s326
      %p340 = scmp.eq.s32.totalorder %s46, 3
      %p341 = por %p339, %p340
      %p343 = scmp.ne.s32.totalorder %s326, %s342
      %p344 = scmp.eq.s32.totalorder %s46, 0
      %p345 = por %p343, %p344
      %s346 = ssub.s32 %s48, %s55
      %p347 = scmp.eq.s32.totalorder %s346, 0
      %s349 = sadd.s32 %s348, 1
      %s350 = scalar_select %p347, %s348, %s349
      %p353 = pneg %p347
      %p354 = scmp.eq.s32.totalorder %s40, 3
      %p355 = por %p353, %p354
      %p356 = scmp.ne.s32.totalorder %s348, %s351
      %p357 = scmp.eq.s32.totalorder %s40, 0
      %p358 = por %p356, %p357
      %p359 = scmp.ne.s32.totalorder %s348, %s351
      %p360 = scmp.eq.s32.totalorder %s45, 3
      %p361 = por %p359, %p360
      %p362 = scmp.ne.s32.totalorder %s351, %s352
      %p363 = scmp.eq.s32.totalorder %s45, 0
      %p364 = por %p362, %p363
      %p365 = scmp.ne.s32.totalorder %s351, %s352
      %p366 = scmp.eq.s32.totalorder %s46, 3
      %p367 = por %p365, %p366
      %p369 = scmp.ne.s32.totalorder %s352, %s368
      %p370 = scmp.eq.s32.totalorder %s46, 0
      %p371 = por %p369, %p370
      %s372 = ssub.s32 %s48, %s55
      %p373 = scmp.eq.s32.totalorder %s372, 0
      %s375 = sadd.s32 %s374, 1
      %s376 = scalar_select %p373, %s374, %s375
      %p379 = pneg %p373
      %p380 = scmp.eq.s32.totalorder %s40, 3
      %p381 = por %p379, %p380
      %p382 = scmp.ne.s32.totalorder %s374, %s377
      %p383 = scmp.eq.s32.totalorder %s40, 0
      %p384 = por %p382, %p383
      %p385 = scmp.ne.s32.totalorder %s374, %s377
      %p386 = scmp.eq.s32.totalorder %s45, 3
      %p387 = por %p385, %p386
      %p388 = scmp.ne.s32.totalorder %s377, %s378
      %p389 = scmp.eq.s32.totalorder %s45, 0
      %p390 = por %p388, %p389
      %p391 = scmp.ne.s32.totalorder %s377, %s378
      %p392 = scmp.eq.s32.totalorder %s46, 3
      %p393 = por %p391, %p392
      %p395 = scmp.ne.s32.totalorder %s378, %s394
      %p396 = scmp.eq.s32.totalorder %s46, 0
      %p397 = por %p395, %p396
      %s398 = ssub.s32 %s48, %s55
      %p399 = scmp.eq.s32.totalorder %s398, 0
      %s401 = sadd.s32 %s400, 1
      %s402 = scalar_select %p399, %s400, %s401
      %p405 = pneg %p399
      %p406 = scmp.eq.s32.totalorder %s40, 3
      %p407 = por %p405, %p406
      %p408 = scmp.ne.s32.totalorder %s400, %s403
      %p409 = scmp.eq.s32.totalorder %s40, 0
      %p410 = por %p408, %p409
      %p411 = scmp.ne.s32.totalorder %s400, %s403
      %p412 = scmp.eq.s32.totalorder %s45, 3
      %p413 = por %p411, %p412
      %p414 = scmp.ne.s32.totalorder %s403, %s404
      %p415 = scmp.eq.s32.totalorder %s45, 0
      %p416 = por %p414, %p415
      %p417 = scmp.ne.s32.totalorder %s403, %s404
      %p418 = scmp.eq.s32.totalorder %s46, 3
      %p419 = por %p417, %p418
      %p421 = scmp.ne.s32.totalorder %s404, %s420
      %p422 = scmp.eq.s32.totalorder %s46, 0
      %p423 = por %p421, %p422
      %s425 = sadd.s32 %s424, 1
      %p428 = scmp.eq.s32.totalorder %s40, 3
      %p429 = scmp.ne.s32.totalorder %s424, %s426
      %p430 = scmp.eq.s32.totalorder %s40, 0
      %p431 = por %p429, %p430
      %p432 = scmp.ne.s32.totalorder %s424, %s426
      %p433 = scmp.eq.s32.totalorder %s45, 3
      %p434 = por %p432, %p433
      %p435 = scmp.ne.s32.totalorder %s426, %s427
      %p436 = scmp.eq.s32.totalorder %s45, 0
      %p437 = por %p435, %p436
      %p438 = scmp.ne.s32.totalorder %s426, %s427
      %p439 = scmp.eq.s32.totalorder %s46, 3
      %p440 = por %p438, %p439
      %p442 = scmp.ne.s32.totalorder %s427, %s441
      %p443 = scmp.eq.s32.totalorder %s46, 0
      %p444 = por %p442, %p443
      %s446 = sadd.s32 %s445, 1
      %p449 = scmp.eq.s32.totalorder %s40, 3
      %p450 = scmp.ne.s32.totalorder %s445, %s447
      %p451 = scmp.eq.s32.totalorder %s40, 0
      %p452 = por %p450, %p451
      %p453 = scmp.ne.s32.totalorder %s445, %s447
      %p454 = scmp.eq.s32.totalorder %s45, 3
      %p455 = por %p453, %p454
      %p456 = scmp.ne.s32.totalorder %s447, %s448
      %p457 = scmp.eq.s32.totalorder %s45, 0
      %p458 = por %p456, %p457
      %p459 = scmp.ne.s32.totalorder %s447, %s448
      %p460 = scmp.eq.s32.totalorder %s46, 3
      %p461 = por %p459, %p460
      %p463 = scmp.ne.s32.totalorder %s448, %s462
      %p464 = scmp.eq.s32.totalorder %s46, 0
      %p465 = por %p463, %p464
      %s466 = ssub.s32 %s47, %s59
      %p467 = scmp.eq.s32.totalorder %s466, 0
      %s469 = sadd.s32 %s468, 1
      %s470 = scalar_select %p467, %s468, %s469
      %p473 = pneg %p467
      %p474 = scmp.eq.s32.totalorder %s40, 3
      %p475 = por %p473, %p474
      %p476 = scmp.ne.s32.totalorder %s468, %s471
      %p477 = scmp.eq.s32.totalorder %s40, 0
      %p478 = por %p476, %p477
      %p479 = scmp.ne.s32.totalorder %s468, %s471
      %p480 = scmp.eq.s32.totalorder %s45, 3
      %p481 = por %p479, %p480
      %p482 = scmp.ne.s32.totalorder %s471, %s472
      %p483 = scmp.eq.s32.totalorder %s45, 0
      %p484 = por %p482, %p483
      %p485 = scmp.ne.s32.totalorder %s471, %s472
      %p486 = scmp.eq.s32.totalorder %s46, 3
      %p487 = por %p485, %p486
      %p489 = scmp.ne.s32.totalorder %s472, %s488
      %p490 = scmp.eq.s32.totalorder %s46, 0
      %p491 = por %p489, %p490
      %p492 = scmp.le.s32.totalorder 1, %s40
      %p493 = scmp.lt.s32.totalorder %s40, 5
      %p494 = pnand %p492, %p493
      %p495 = pneg %p494
      // Predicated region
      $region9: #{tpu_custom_call.1} parent=5 // pred_check
        _
      $region10: #{tpu_custom_call.1} parent=5 // pred_check_branch
        %497 = sbr.rel (%p494) target = $region12
      $region11: #{tpu_custom_call.1} parent=5 // pred_region
        %s498 = ssub.s32 %s40, 1
        // Predicated region
        $region13: #{tpu_custom_call.1} parent=11 // pred_check
          %p499 = pneg %p437
        $region14: #{tpu_custom_call.1} parent=11 // pred_check_branch
          %501 = sbr.rel (%p499) target = $region16
        $region15: #{tpu_custom_call.1} parent=11 // pred_region
          _
        $region16: #{tpu_custom_call.1} parent=11 // pred_fallthru
          _
        // Predicated region
        $region17: #{tpu_custom_call.1} parent=11 // pred_check
          %p502 = pneg %p458
        $region18: #{tpu_custom_call.1} parent=11 // pred_check_branch
          %504 = sbr.rel (%p502) target = $region20
        $region19: #{tpu_custom_call.1} parent=11 // pred_region
          _
        $region20: #{tpu_custom_call.1} parent=11 // pred_fallthru
          _
      $region12: #{tpu_custom_call.1} parent=5 // pred_fallthru
        _
      %p505 = scmp.lt.s32.totalorder %s40, 4
      // Predicated region
      $region21: #{tpu_custom_call.1} parent=5 // pred_check
        %p506 = pneg %p505
      $region22: #{tpu_custom_call.1} parent=5 // pred_check_branch
        %508 = sbr.rel (%p506) target = $region24
      $region23: #{tpu_custom_call.1} parent=5 // pred_region
        // Predicated region
        $region25: #{tpu_custom_call.1} parent=23 // pred_check
          %p509 = pneg %p72
        $region26: #{tpu_custom_call.1} parent=23 // pred_check_branch
          %511 = sbr.rel (%p509) target = $region28
        $region27: #{tpu_custom_call.1} parent=23 // pred_region
          %s512 = sand.u32 %s62, 1
          %s513 = scalar_lea.sflag [#allocation4], %s512
          %s514 = sand.u32 %s62, 1
          %s515 = smul.addr %s514, 8
          %s516 = scalar_lea.vmem [#allocation3], %s515
          %518 = vsyncadd %s513, 0
          %s519 = smul.addr %s47, 8
          %s520 = scalar_lea.hbm %s0, %s519
          %s522 = sshll.u32 %s520, 4
          %s523 = int_to_ptr.hbm [resolvable:$true] %s522
          %s524 = sshll.u32 %s516, 4
          %s525 = int_to_ptr.vmem [resolvable:$true] %s524
          %527 = dma.hbm_to_vmem [thread:$0]  %s523, 128, %s525, %s513
        $region28: #{tpu_custom_call.1} parent=23 // pred_fallthru
          _
        // Predicated region
        $region29: #{tpu_custom_call.1} parent=23 // pred_check
          %p528 = pneg %p98
        $region30: #{tpu_custom_call.1} parent=23 // pred_check_branch
          %530 = sbr.rel (%p528) target = $region32
        $region31: #{tpu_custom_call.1} parent=23 // pred_region
          %s531 = sand.u32 %s40, 1
          %s532 = scalar_lea.sflag [#allocation7], %s531
          %s533 = sand.u32 %s88, 1
          %s534 = scalar_lea.vmem [#allocation6], %s533
          %536 = vsyncadd %s532, 0
          %s537 = scalar_lea.hbm %s1, %s47
          %s539 = sshll.u32 %s537, 4
          %s540 = int_to_ptr.hbm [resolvable:$true] %s539
          %s541 = sshll.u32 %s534, 4
          %s542 = int_to_ptr.vmem [resolvable:$true] %s541
          %544 = dma.hbm_to_vmem [thread:$0]  %s540, 16, %s542, %s532
        $region32: #{tpu_custom_call.1} parent=23 // pred_fallthru
          _
        // Predicated region
        $region33: #{tpu_custom_call.1} parent=23 // pred_check
          %p545 = pneg %p124
        $region34: #{tpu_custom_call.1} parent=23 // pred_check_branch
          %547 = sbr.rel (%p545) target = $region36
        $region35: #{tpu_custom_call.1} parent=23 // pred_region
          %s548 = sand.u32 %s40, 1
          %s549 = scalar_lea.sflag [#allocation7], %s548
          %s550 = sand.u32 %s114, 1
          %s551 = scalar_lea.vmem [#allocation8], %s550
          %553 = vsyncadd %s549, 0
          %s554 = scalar_lea.hbm %s2, %s48
          %s556 = sshll.u32 %s554, 4
          %s557 = int_to_ptr.hbm [resolvable:$true] %s556
          %s558 = sshll.u32 %s551, 4
          %s559 = int_to_ptr.vmem [resolvable:$true] %s558
          %561 = dma.hbm_to_vmem [thread:$0]  %s557, 16, %s559, %s549
        $region36: #{tpu_custom_call.1} parent=23 // pred_fallthru
          _
        // Predicated region
        $region37: #{tpu_custom_call.1} parent=23 // pred_check
          %p562 = pneg %p150
        $region38: #{tpu_custom_call.1} parent=23 // pred_check_branch
          %564 = sbr.rel (%p562) target = $region40
        $region39: #{tpu_custom_call.1} parent=23 // pred_region
          %p565 = scmp.lt.s32.totalorder %s48, 1
          %s566 = scalar_select %p565, %s48, 1
          %s567 = scalar_lea.vmem %s3, %s566
        $region40: #{tpu_custom_call.1} parent=23 // pred_fallthru
          _
        // Predicated region
        $region41: #{tpu_custom_call.1} parent=23 // pred_check
          %p568 = pneg %p176
        $region42: #{tpu_custom_call.1} parent=23 // pred_check_branch
          %570 = sbr.rel (%p568) target = $region44
        $region43: #{tpu_custom_call.1} parent=23 // pred_region
          %s571 = sand.u32 %s40, 1
          %s572 = scalar_lea.sflag [#allocation10], %s571
          %s573 = sand.u32 %s166, 1
          %s574 = smul.addr %s573, 384
          %s575 = scalar_lea.vmem [#allocation9], %s574
          %577 = vsyncadd %s572, 0
          %s578 = smul.addr %s48, 48
          %s579 = smul.addr %s578, 8
          %s580 = scalar_lea.hbm %s4, %s579
          %s581 = sshll.u32 %s580, 4
          %s582 = int_to_ptr.hbm [resolvable:$true] %s581
          %s583 = sshll.u32 %s575, 4
          %s584 = int_to_ptr.vmem [resolvable:$true] %s583
          %589 = dma.hbm_to_vmem [thread:$0]  %s582, 6144, %s584, %s572, 384, 384, 24
        $region44: #{tpu_custom_call.1} parent=23 // pred_fallthru
          _
        // Predicated region
        $region45: #{tpu_custom_call.1} parent=23 // pred_check
          %p590 = pneg %p202
        $region46: #{tpu_custom_call.1} parent=23 // pred_check_branch
          %592 = sbr.rel (%p590) target = $region48
        $region47: #{tpu_custom_call.1} parent=23 // pred_region
          %s593 = sand.u32 %s40, 1
          %s594 = scalar_lea.sflag [#allocation10], %s593
          %s595 = sand.u32 %s192, 1
          %s596 = smul.addr %s595, 3
          %s597 = scalar_lea.vmem [#allocation11], %s596
          %599 = vsyncadd %s594, 0
          %s600 = smul.addr %s48, 3
          %s601 = scalar_lea.hbm %s5, %s600
          %s603 = sshll.u32 %s601, 4
          %s604 = int_to_ptr.hbm [resolvable:$true] %s603
          %s605 = sshll.u32 %s597, 4
          %s606 = int_to_ptr.vmem [resolvable:$true] %s605
          %608 = dma.hbm_to_vmem [thread:$0]  %s604, 48, %s606, %s594
        $region48: #{tpu_custom_call.1} parent=23 // pred_fallthru
          _
        // Predicated region
        $region49: #{tpu_custom_call.1} parent=23 // pred_check
          %p609 = pneg %p228
        $region50: #{tpu_custom_call.1} parent=23 // pred_check_branch
          %611 = sbr.rel (%p609) target = $region52
        $region51: #{tpu_custom_call.1} parent=23 // pred_region
          %s612 = sand.u32 %s40, 1
          %s613 = scalar_lea.sflag [#allocation13], %s612
          %s614 = sand.u32 %s218, 1
          %s615 = smul.addr %s614, 128
          %s616 = scalar_lea.vmem [#allocation12], %s615
          %618 = vsyncadd %s613, 0
          %s619 = smul.addr %s48, 16
          %s620 = smul.addr %s619, 8
          %s621 = scalar_lea.hbm %s6, %s620
          %s622 = sshll.u32 %s621, 4
          %s623 = int_to_ptr.hbm [resolvable:$true] %s622
          %s624 = sshll.u32 %s616, 4
          %s625 = int_to_ptr.vmem [resolvable:$true] %s624
          %630 = dma.hbm_to_vmem [thread:$0]  %s623, 2048, %s625, %s613, 128, 128, 8
        $region52: #{tpu_custom_call.1} parent=23 // pred_fallthru
          _
        // Predicated region
        $region53: #{tpu_custom_call.1} parent=23 // pred_check
          %p631 = pneg %p254
        $region54: #{tpu_custom_call.1} parent=23 // pred_check_branch
          %633 = sbr.rel (%p631) target = $region56
        $region55: #{tpu_custom_call.1} parent=23 // pred_region
          %p634 = scmp.lt.s32.totalorder %s48, 1
          %s635 = scalar_select %p634, %s48, 1
          %s636 = scalar_lea.vmem %s7, %s635
        $region56: #{tpu_custom_call.1} parent=23 // pred_fallthru
          _
        // Predicated region
        $region57: #{tpu_custom_call.1} parent=23 // pred_check
          %p637 = pneg %p280
        $region58: #{tpu_custom_call.1} parent=23 // pred_check_branch
          %639 = sbr.rel (%p637) target = $region60
        $region59: #{tpu_custom_call.1} parent=23 // pred_region
          %p640 = scmp.lt.s32.totalorder %s48, 1
          %s641 = scalar_select %p640, %s48, 1
          %s642 = scalar_lea.vmem %s8, %s641
        $region60: #{tpu_custom_call.1} parent=23 // pred_fallthru
          _
        // Predicated region
        $region61: #{tpu_custom_call.1} parent=23 // pred_check
          %p643 = pneg %p306
        $region62: #{tpu_custom_call.1} parent=23 // pred_check_branch
          %645 = sbr.rel (%p643) target = $region64
        $region63: #{tpu_custom_call.1} parent=23 // pred_region
          %p646 = scmp.lt.s32.totalorder %s48, 1
          %s647 = scalar_select %p646, %s48, 1
          %s648 = scalar_lea.vmem %s9, %s647
        $region64: #{tpu_custom_call.1} parent=23 // pred_fallthru
          _
        // Predicated region
        $region65: #{tpu_custom_call.1} parent=23 // pred_check
          %p649 = pneg %p332
        $region66: #{tpu_custom_call.1} parent=23 // pred_check_branch
          %651 = sbr.rel (%p649) target = $region68
        $region67: #{tpu_custom_call.1} parent=23 // pred_region
          %s652 = sand.u32 %s40, 1
          %s653 = scalar_lea.sflag [#allocation13], %s652
          %s654 = sand.u32 %s322, 1
          %s655 = smul.addr %s654, 128
          %s656 = scalar_lea.vmem [#allocation14], %s655
          %658 = vsyncadd %s653, 0
          %s659 = smul.addr %s48, 16
          %s660 = smul.addr %s659, 8
          %s661 = scalar_lea.hbm %s10, %s660
          %s662 = sshll.u32 %s661, 4
          %s663 = int_to_ptr.hbm [resolvable:$true] %s662
          %s664 = sshll.u32 %s656, 4
          %s665 = int_to_ptr.vmem [resolvable:$true] %s664
          %670 = dma.hbm_to_vmem [thread:$0]  %s663, 2048, %s665, %s653, 128, 128, 8
        $region68: #{tpu_custom_call.1} parent=23 // pred_fallthru
          _
        // Predicated region
        $region69: #{tpu_custom_call.1} parent=23 // pred_check
          %p671 = pneg %p358
        $region70: #{tpu_custom_call.1} parent=23 // pred_check_branch
          %673 = sbr.rel (%p671) target = $region72
        $region71: #{tpu_custom_call.1} parent=23 // pred_region
          %p674 = scmp.lt.s32.totalorder %s48, 1
          %s675 = scalar_select %p674, %s48, 1
          %s676 = scalar_lea.vmem %s11, %s675
        $region72: #{tpu_custom_call.1} parent=23 // pred_fallthru
          _
        // Predicated region
        $region73: #{tpu_custom_call.1} parent=23 // pred_check
          %p677 = pneg %p384
        $region74: #{tpu_custom_call.1} parent=23 // pred_check_branch
          %679 = sbr.rel (%p677) target = $region76
        $region75: #{tpu_custom_call.1} parent=23 // pred_region
          %s680 = sand.u32 %s374, 1
          %s681 = scalar_lea.sflag [#allocation16], %s680
          %s682 = sand.u32 %s374, 1
          %s683 = smul.addr %s682, 128
          %s684 = scalar_lea.vmem [#allocation15], %s683
          %686 = vsyncadd %s681, 0
          %s687 = smul.addr %s48, 16
          %s688 = smul.addr %s687, 8
          %s689 = scalar_lea.hbm %s12, %s688
          %s690 = sshll.u32 %s689, 4
          %s691 = int_to_ptr.hbm [resolvable:$true] %s690
          %s692 = sshll.u32 %s684, 4
          %s693 = int_to_ptr.vmem [resolvable:$true] %s692
          %698 = dma.hbm_to_vmem [thread:$0]  %s691, 2048, %s693, %s681, 128, 128, 8
        $region76: #{tpu_custom_call.1} parent=23 // pred_fallthru
          _
        // Predicated region
        $region77: #{tpu_custom_call.1} parent=23 // pred_check
          %p699 = pneg %p410
        $region78: #{tpu_custom_call.1} parent=23 // pred_check_branch
          %701 = sbr.rel (%p699) target = $region80
        $region79: #{tpu_custom_call.1} parent=23 // pred_region
          %p702 = scmp.lt.s32.totalorder %s48, 1
          %s703 = scalar_select %p702, %s48, 1
          %s704 = scalar_lea.vmem %s13, %s703
        $region80: #{tpu_custom_call.1} parent=23 // pred_fallthru
          _
      $region24: #{tpu_custom_call.1} parent=5 // pred_fallthru
        _
      %p705 = scmp.le.s32.totalorder 1, %s40
      %p706 = scmp.lt.s32.totalorder %s40, 5
      %p707 = pnand %p705, %p706
      %p708 = pneg %p707
      // Predicated region
      $region81: #{tpu_custom_call.1} parent=5 // pred_check
        _
      $region82: #{tpu_custom_call.1} parent=5 // pred_check_branch
        %710 = sbr.rel (%p707) target = $region84
      $region83: #{tpu_custom_call.1} parent=5 // pred_region
        %s711 = ssub.s32 %s40, 1
        %s712 = sand.u32 %s65, 1
        %s713 = scalar_lea.sflag [#allocation4], %s712
        %s714 = sand.u32 %s65, 1
        %s715 = smul.addr %s714, 8
        %s716 = scalar_lea.vmem [#allocation3], %s715
        // Predicated region
        $region85: #{tpu_custom_call.1} parent=83 // pred_check
          %p717 = pneg %p78
        $region86: #{tpu_custom_call.1} parent=83 // pred_check_branch
          %719 = sbr.rel (%p717) target = $region88
        $region87: #{tpu_custom_call.1} parent=83 // pred_region
          %721 = dma.done %s713, 128
        $region88: #{tpu_custom_call.1} parent=83 // pred_fallthru
          _
        %s722 = sand.u32 %s45, 1
        %s723 = scalar_lea.sflag [#allocation7], %s722
        %s724 = sand.u32 %s91, 1
        %s725 = scalar_lea.vmem [#allocation6], %s724
        // Predicated region
        $region89: #{tpu_custom_call.1} parent=83 // pred_check
          %p726 = pneg %p104
        $region90: #{tpu_custom_call.1} parent=83 // pred_check_branch
          %728 = sbr.rel (%p726) target = $region92
        $region91: #{tpu_custom_call.1} parent=83 // pred_region
          %730 = dma.done %s723, 16
        $region92: #{tpu_custom_call.1} parent=83 // pred_fallthru
          _
        %s731 = sand.u32 %s45, 1
        %s732 = scalar_lea.sflag [#allocation7], %s731
        %s733 = sand.u32 %s117, 1
        %s734 = scalar_lea.vmem [#allocation8], %s733
        // Predicated region
        $region93: #{tpu_custom_call.1} parent=83 // pred_check
          %p735 = pneg %p130
        $region94: #{tpu_custom_call.1} parent=83 // pred_check_branch
          %737 = sbr.rel (%p735) target = $region96
        $region95: #{tpu_custom_call.1} parent=83 // pred_region
          %739 = dma.done %s732, 16
        $region96: #{tpu_custom_call.1} parent=83 // pred_fallthru
          _
        %s740 = sand.u32 %s45, 1
        %s741 = scalar_lea.sflag [#allocation10], %s740
        %s742 = sand.u32 %s169, 1
        %s743 = smul.addr %s742, 384
        %s744 = scalar_lea.vmem [#allocation9], %s743
        // Predicated region
        $region97: #{tpu_custom_call.1} parent=83 // pred_check
          %p745 = pneg %p182
        $region98: #{tpu_custom_call.1} parent=83 // pred_check_branch
          %747 = sbr.rel (%p745) target = $region100
        $region99: #{tpu_custom_call.1} parent=83 // pred_region
          %749 = dma.done %s741, 6144
        $region100: #{tpu_custom_call.1} parent=83 // pred_fallthru
          _
        %s750 = sand.u32 %s45, 1
        %s751 = scalar_lea.sflag [#allocation10], %s750
        %s752 = sand.u32 %s195, 1
        %s753 = smul.addr %s752, 3
        %s754 = scalar_lea.vmem [#allocation11], %s753
        // Predicated region
        $region101: #{tpu_custom_call.1} parent=83 // pred_check
          %p755 = pneg %p208
        $region102: #{tpu_custom_call.1} parent=83 // pred_check_branch
          %757 = sbr.rel (%p755) target = $region104
        $region103: #{tpu_custom_call.1} parent=83 // pred_region
          %759 = dma.done %s751, 48
        $region104: #{tpu_custom_call.1} parent=83 // pred_fallthru
          _
        %s760 = sand.u32 %s45, 1
        %s761 = scalar_lea.sflag [#allocation13], %s760
        %s762 = sand.u32 %s221, 1
        %s763 = smul.addr %s762, 128
        %s764 = scalar_lea.vmem [#allocation12], %s763
        // Predicated region
        $region105: #{tpu_custom_call.1} parent=83 // pred_check
          %p765 = pneg %p234
        $region106: #{tpu_custom_call.1} parent=83 // pred_check_branch
          %767 = sbr.rel (%p765) target = $region108
        $region107: #{tpu_custom_call.1} parent=83 // pred_region
          %769 = dma.done %s761, 2048
        $region108: #{tpu_custom_call.1} parent=83 // pred_fallthru
          _
        %s770 = sand.u32 %s45, 1
        %s771 = scalar_lea.sflag [#allocation13], %s770
        %s772 = sand.u32 %s325, 1
        %s773 = smul.addr %s772, 128
        %s774 = scalar_lea.vmem [#allocation14], %s773
        // Predicated region
        $region109: #{tpu_custom_call.1} parent=83 // pred_check
          %p775 = pneg %p338
        $region110: #{tpu_custom_call.1} parent=83 // pred_check_branch
          %777 = sbr.rel (%p775) target = $region112
        $region111: #{tpu_custom_call.1} parent=83 // pred_region
          %779 = dma.done %s771, 2048
        $region112: #{tpu_custom_call.1} parent=83 // pred_fallthru
          _
        %s780 = sand.u32 %s377, 1
        %s781 = scalar_lea.sflag [#allocation16], %s780
        %s782 = sand.u32 %s377, 1
        %s783 = smul.addr %s782, 128
        %s784 = scalar_lea.vmem [#allocation15], %s783
        // Predicated region
        $region113: #{tpu_custom_call.1} parent=83 // pred_check
          %p785 = pneg %p390
        $region114: #{tpu_custom_call.1} parent=83 // pred_check_branch
          %787 = sbr.rel (%p785) target = $region116
        $region115: #{tpu_custom_call.1} parent=83 // pred_region
          %789 = dma.done %s781, 2048
        $region116: #{tpu_custom_call.1} parent=83 // pred_fallthru
          _
        %s790 = sand.u32 %s65, 1
        %s791 = scalar_lea.sflag [#allocation4], %s790
        %s792 = sand.u32 %s65, 1
        %s793 = smul.addr %s792, 8
        %s794 = scalar_lea.vmem [#allocation3], %s793
        %p795 = pneg %p78
        %p796 = pneg %p75
        %s797 = sand.u32 %s45, 1
        %s798 = scalar_lea.sflag [#allocation7], %s797
        %s799 = sand.u32 %s91, 1
        %s800 = scalar_lea.vmem [#allocation6], %s799
        %p801 = pneg %p104
        %p802 = pneg %p101
        %s803 = sand.u32 %s45, 1
        %s804 = scalar_lea.sflag [#allocation7], %s803
        %s805 = sand.u32 %s117, 1
        %s806 = scalar_lea.vmem [#allocation8], %s805
        %p807 = pneg %p130
        %p808 = pneg %p127
        %p809 = scmp.lt.s32.totalorder %s50, 1
        %s810 = scalar_select %p809, %s50, 1
        %s811 = scalar_lea.vmem %s3, %s810
        %p812 = pneg %p156
        %p813 = pneg %p153
        %s814 = sand.u32 %s45, 1
        %s815 = scalar_lea.sflag [#allocation10], %s814
        %s816 = sand.u32 %s169, 1
        %s817 = smul.addr %s816, 384
        %s818 = scalar_lea.vmem [#allocation9], %s817
        %p819 = pneg %p182
        %p820 = pneg %p179
        %s821 = sand.u32 %s45, 1
        %s822 = scalar_lea.sflag [#allocation10], %s821
        %s823 = sand.u32 %s195, 1
        %s824 = smul.addr %s823, 3
        %s825 = scalar_lea.vmem [#allocation11], %s824
        %p826 = pneg %p208
        %p827 = pneg %p205
        %s828 = sand.u32 %s45, 1
        %s829 = scalar_lea.sflag [#allocation13], %s828
        %s830 = sand.u32 %s221, 1
        %s831 = smul.addr %s830, 128
        %s832 = scalar_lea.vmem [#allocation12], %s831
        %p833 = pneg %p234
        %p834 = pneg %p231
        %p835 = scmp.lt.s32.totalorder %s50, 1
        %s836 = scalar_select %p835, %s50, 1
        %s837 = scalar_lea.vmem %s7, %s836
        %p838 = pneg %p260
        %p839 = pneg %p257
        %p840 = scmp.lt.s32.totalorder %s50, 1
        %s841 = scalar_select %p840, %s50, 1
        %s842 = scalar_lea.vmem %s8, %s841
        %p843 = pneg %p286
        %p844 = pneg %p283
        %p845 = scmp.lt.s32.totalorder %s50, 1
        %s846 = scalar_select %p845, %s50, 1
        %s847 = scalar_lea.vmem %s9, %s846
        %p848 = pneg %p312
        %p849 = pneg %p309
        %s850 = sand.u32 %s45, 1
        %s851 = scalar_lea.sflag [#allocation13], %s850
        %s852 = sand.u32 %s325, 1
        %s853 = smul.addr %s852, 128
        %s854 = scalar_lea.vmem [#allocation14], %s853
        %p855 = pneg %p338
        %p856 = pneg %p335
        %p857 = scmp.lt.s32.totalorder %s50, 1
        %s858 = scalar_select %p857, %s50, 1
        %s859 = scalar_lea.vmem %s11, %s858
        %p860 = pneg %p364
        %p861 = pneg %p361
        %s862 = sand.u32 %s377, 1
        %s863 = scalar_lea.sflag [#allocation16], %s862
        %s864 = sand.u32 %s377, 1
        %s865 = smul.addr %s864, 128
        %s866 = scalar_lea.vmem [#allocation15], %s865
        %p867 = pneg %p390
        %p868 = pneg %p387
        %p869 = scmp.lt.s32.totalorder %s50, 1
        %s870 = scalar_select %p869, %s50, 1
        %s871 = scalar_lea.vmem %s13, %s870
        %p872 = pneg %p416
        %p873 = pneg %p413
        %p874 = pneg %p437
        %p875 = pneg %p434
        %p876 = pneg %p458
        %p877 = pneg %p455
        %p878 = pneg %p484
        %p879 = pneg %p481
        %s880 = sand.u32 %s471, 1
        %s881 = scalar_lea.sflag [#allocation5], %s880
        %s882 = sand.u32 %s471, 1
        %s883 = smul.addr %s882, 8
        %s884 = scalar_lea.vmem [#allocation17], %s883
        %p885 = scmp.lt.s32.totalorder %s50, 1
        %s886 = scalar_select %p885, %s50, 1
        %s887 = scalar_lea.vmem %s3, %s886
        %p888 = scmp.lt.s32.totalorder %s50, 1
        %s889 = scalar_select %p888, %s50, 1
        %s890 = scalar_lea.vmem %s7, %s889
        %p891 = scmp.lt.s32.totalorder %s50, 1
        %s892 = scalar_select %p891, %s50, 1
        %s893 = scalar_lea.vmem %s8, %s892
        %p894 = scmp.lt.s32.totalorder %s50, 1
        %s895 = scalar_select %p894, %s50, 1
        %s896 = scalar_lea.vmem %s9, %s895
        %p897 = scmp.lt.s32.totalorder %s50, 1
        %s898 = scalar_select %p897, %s50, 1
        %s899 = scalar_lea.vmem %s11, %s898
        %p900 = scmp.lt.s32.totalorder %s50, 1
        %s901 = scalar_select %p900, %s50, 1
        %s902 = scalar_lea.vmem %s13, %s901
        %p903 = scmp.eq.s32.totalorder %s50, 0
        // Predicated region
        $region117: #{tpu_custom_call.1} parent=83 // pred_check
          %p904 = pneg %p903
        $region118: #{tpu_custom_call.1} parent=83 // pred_check_branch
          %906 = sbr.rel (%p904) target = $region120
        $region119: #{tpu_custom_call.1} parent=83 // pred_region
          %v907 = vld [vmem:[%s716] sm:$0xff]
          %908 = vst [vmem:[#allocation2] sm:$0xff] %v907
        $region120: #{tpu_custom_call.1} parent=83 // pred_fallthru
          _
        %v909 = vld [vmem:[#allocation2] sm:$0xff]
        %v910 = vld [vmem:[%s725] sm:$0x1]
        %vm911 = vcmp.lt.f32.partialorder %v910, 0.5
        %v912 = vlaneseq
        %v913 = vand.u32 %v912, 127
        %vm914 = vcmp.lt.s32.totalorder %v913, 32
        %v915 = vsel %vm914, 1, 0
        %v916 = vcvt.s32.f32 %v915
        %v917 = vld [vmem:[%s734] sm:$0x1]
        %v918 = vld [vmem:[%s887] sm:$0x1]
        %919 = vadd.xlane.f32.xlu0 %v909
        %v920 = vpop.xlane.xlu0 %919
        %v921 = vmul.f32 %v920, 0.03125
        %v922 = vsub.f32 %v909, %v921
        %v923 = vmul.f32 %v922, %v916
        %v924 = vmul.f32 %v923, %v923
        %925 = vadd.xlane.f32.xlu0 %v924
        %v926 = vpop.xlane.xlu0 %925
        %v927 = vmul.f32 %v926, 0.032258064
        %v929 = vperm.slane %v917, 0
        %v931 = vmul.f32 %v929, %v922
        %v932 = vrsqrt.pop %v927
        %v933 = vmul.f32 %v932, %v927
        %v934 = vmul.f32 %v933, %v932
        %v935 = vmul.f32 0.5, %v934
        %v936 = vsub.f32 1.5, %v935
        %v937 = vmul.f32 %v932, %v936
        %v938 = vmul.f32 %v927, %v937
        %vm939 = vcmp.eq.f32.partialorder %v927, inf
        %v940 = vsel %vm939, %v927, %v938
        %vm941 = vcmp.eq.f32.partialorder %v927, 0.0
        %v942 = vand.u32 %v927, 2147483648
        %v943 = vsel %vm941, %v942, %v940
        %v944 = vadd.f32 %v943, 1e-06
        %v945 = vrcp.pop %v944
        %v946 = vmul.f32 %v944, %v945
        %v947 = vsub.f32 1.0, %v946
        %v948 = vmul.f32 %v945, %v947
        %v949 = vadd.f32 %v945, %v948
        %vm950 = vweird.f32 %v944
        %vm951 = vweird.f32 %v945
        %vm952 = vmor %vm950, %vm951
        %v953 = vsel %vm952, %v945, %v949
        %v954 = vand.u32 2147483647, %v944
        %vm955 = vcmp.eq.f32.partialorder %v954, 8.507059e+37
        %v956 = vand.u32 %v944, 2147483648
        %v957 = vor.u32 1.1754944e-38, %v956
        %v958 = vsel %vm955, %v957, %v953
        %v959 = vmul.f32 %v931, %v958
        %v961 = vperm.slane %v918, 0
        %v963 = vadd.f32 %v959, %v961
        %v964 = vld [vmem:[%s744] sm:$0xff]
        %v965 = vld [vmem:[%s744 + $0x8] sm:$0xff]
        %v966 = vld [vmem:[%s744 + $0x10] sm:$0xff]
        %v967 = vld [vmem:[%s744 + $0x18] sm:$0xff]
        %v968 = vld [vmem:[%s744 + $0x20] sm:$0xff]
        %v969 = vld [vmem:[%s744 + $0x28] sm:$0xff]
        %v970 = vld [vmem:[%s744 + $0x30] sm:$0xff]
        %v971 = vld [vmem:[%s744 + $0x38] sm:$0xff]
        %v972 = vld [vmem:[%s744 + $0x40] sm:$0xff]
        %v973 = vld [vmem:[%s744 + $0x48] sm:$0xff]
        %v974 = vld [vmem:[%s744 + $0x50] sm:$0xff]
        %v975 = vld [vmem:[%s744 + $0x58] sm:$0xff]
        %v976 = vld [vmem:[%s744 + $0x60] sm:$0xff]
        %v977 = vld [vmem:[%s744 + $0x68] sm:$0xff]
        %v978 = vld [vmem:[%s744 + $0x70] sm:$0xff]
        %v979 = vld [vmem:[%s744 + $0x78] sm:$0xff]
        %v980 = vld [vmem:[%s744 + $0x80] sm:$0xff]
        %v981 = vld [vmem:[%s744 + $0x88] sm:$0xff]
        %v982 = vld [vmem:[%s744 + $0x90] sm:$0xff]
        %v983 = vld [vmem:[%s744 + $0x98] sm:$0xff]
        %v984 = vld [vmem:[%s744 + $0xa0] sm:$0xff]
        %v985 = vld [vmem:[%s744 + $0xa8] sm:$0xff]
        %v986 = vld [vmem:[%s744 + $0xb0] sm:$0xff]
        %v987 = vld [vmem:[%s744 + $0xb8] sm:$0xff]
        %v988 = vld [vmem:[%s744 + $0xc0] sm:$0xff]
        %v989 = vld [vmem:[%s744 + $0xc8] sm:$0xff]
        %v990 = vld [vmem:[%s744 + $0xd0] sm:$0xff]
        %v991 = vld [vmem:[%s744 + $0xd8] sm:$0xff]
        %v992 = vld [vmem:[%s744 + $0xe0] sm:$0xff]
        %v993 = vld [vmem:[%s744 + $0xe8] sm:$0xff]
        %v994 = vld [vmem:[%s744 + $0xf0] sm:$0xff]
        %v995 = vld [vmem:[%s744 + $0xf8] sm:$0xff]
        %v996 = vld [vmem:[%s744 + $0x100] sm:$0xff]
        %v997 = vld [vmem:[%s744 + $0x108] sm:$0xff]
        %v998 = vld [vmem:[%s744 + $0x110] sm:$0xff]
        %v999 = vld [vmem:[%s744 + $0x118] sm:$0xff]
        %v1000 = vld [vmem:[%s744 + $0x120] sm:$0xff]
        %v1001 = vld [vmem:[%s744 + $0x128] sm:$0xff]
        %v1002 = vld [vmem:[%s744 + $0x130] sm:$0xff]
        %v1003 = vld [vmem:[%s744 + $0x138] sm:$0xff]
        %v1004 = vld [vmem:[%s744 + $0x140] sm:$0xff]
        %v1005 = vld [vmem:[%s744 + $0x148] sm:$0xff]
        %v1006 = vld [vmem:[%s744 + $0x150] sm:$0xff]
        %v1007 = vld [vmem:[%s744 + $0x158] sm:$0xff]
        %v1008 = vld [vmem:[%s744 + $0x160] sm:$0xff]
        %v1009 = vld [vmem:[%s744 + $0x168] sm:$0xff]
        %v1010 = vld [vmem:[%s744 + $0x170] sm:$0xff]
        %v1011 = vld [vmem:[%s744 + $0x178] sm:$0xff]
        %v1012 = vld [vmem:[%s754] sm:$0x7]
        %v1014 = vperm.slane %v1012, 0
        %v1015 = vperm.slane %v1012, 1
        %v1016 = vperm.slane %v1012, 2
        %1020 = vmatpush.msra.mxu0 %v1009
        %1021 = vmatpush.msra.mxu0 %v1006
        %1022 = vmatpush.msra.mxu0 %v1003
        %1023 = vmatpush.msra.mxu0 %v1000
        %1024 = vmatpush.msra.mxu0 %v997
        %1025 = vmatpush.msra.mxu0 %v994
        %1026 = vmatpush.msra.mxu0 %v991
        %1027 = vmatpush.msra.mxu0 %v988
        %1028 = vmatpush.msra.mxu0 %v985
        %1029 = vmatpush.msra.mxu0 %v982
        %1030 = vmatpush.msra.mxu0 %v979
        %1031 = vmatpush.msra.mxu0 %v976
        %1032 = vmatpush.msra.mxu0 %v973
        %1033 = vmatpush.msra.mxu0 %v970
        %1034 = vmatpush.msra.mxu0 %v967
        %1035 = vmatpush.msra.mxu0 %v964
        %1036 = vmatmul.f32.gmra.mxu0 %v963
        %v1037 = vpop.f32.mrf.mxu0
        %v1038 = vadd.f32 %v1014, %v1037
        %1039 = vdwg.mxu0
        %1040 = vmatpush.msra.mxu0 %v1010
        %1041 = vmatpush.msra.mxu0 %v1007
        %1042 = vmatpush.msra.mxu0 %v1004
        %1043 = vmatpush.msra.mxu0 %v1001
        %1044 = vmatpush.msra.mxu0 %v998
        %1045 = vmatpush.msra.mxu0 %v995
        %1046 = vmatpush.msra.mxu0 %v992
        %1047 = vmatpush.msra.mxu0 %v989
        %1048 = vmatpush.msra.mxu0 %v986
        %1049 = vmatpush.msra.mxu0 %v983
        %1050 = vmatpush.msra.mxu0 %v980
        %1051 = vmatpush.msra.mxu0 %v977
        %1052 = vmatpush.msra.mxu0 %v974
        %1053 = vmatpush.msra.mxu0 %v971
        %1054 = vmatpush.msra.mxu0 %v968
        %1055 = vmatpush.msra.mxu0 %v965
        %1056 = vmatmul.f32.gmra.mxu0 %v963
        %v1057 = vpop.f32.mrf.mxu0
        %v1058 = vadd.f32 %v1015, %v1057
        %1059 = vdwg.mxu0
        %1060 = vmatpush.msra.mxu0 %v1011
        %1061 = vmatpush.msra.mxu0 %v1008
        %1062 = vmatpush.msra.mxu0 %v1005
        %1063 = vmatpush.msra.mxu0 %v1002
        %1064 = vmatpush.msra.mxu0 %v999
        %1065 = vmatpush.msra.mxu0 %v996
        %1066 = vmatpush.msra.mxu0 %v993
        %1067 = vmatpush.msra.mxu0 %v990
        %1068 = vmatpush.msra.mxu0 %v987
        %1069 = vmatpush.msra.mxu0 %v984
        %1070 = vmatpush.msra.mxu0 %v981
        %1071 = vmatpush.msra.mxu0 %v978
        %1072 = vmatpush.msra.mxu0 %v975
        %1073 = vmatpush.msra.mxu0 %v972
        %1074 = vmatpush.msra.mxu0 %v969
        %1075 = vmatpush.msra.mxu0 %v966
        %1076 = vmatmul.f32.gmra.mxu0 %v963
        %v1077 = vpop.f32.mrf.mxu0
        %v1078 = vadd.f32 %v1016, %v1077
        %1079 = vdwg.mxu0
        %1081 = vrot.lane.b32.xlu0 %v1038, 96
        %v1082 = vpop.permute.xlu0 %1081
        %1083 = vrot.lane.b32.xlu0 %v1038, 64
        %v1084 = vpop.permute.xlu0 %1083
        %1085 = vrot.lane.b32.xlu0 %v1038, 32
        %v1086 = vpop.permute.xlu0 %1085
        %1088 = vrot.lane.b32.xlu0 %v1058, 96
        %v1089 = vpop.permute.xlu0 %1088
        %1091 = vrot.lane.b32.xlu0 %v1058, 64
        %v1092 = vpop.permute.xlu0 %1091
        %1094 = vrot.lane.b32.xlu0 %v1058, 32
        %v1095 = vpop.permute.xlu0 %1094
        %1098 = vrot.lane.b32.xlu0 %v1078, 96
        %v1099 = vpop.permute.xlu0 %1098
        %1101 = vrot.lane.b32.xlu0 %v1078, 64
        %v1102 = vpop.permute.xlu0 %1101
        %1104 = vrot.lane.b32.xlu0 %v1078, 32
        %v1105 = vpop.permute.xlu0 %1104
        %1107 = vxpose.xlu0.b32.start [1/16] %v1058, 128
        %1108 = vxpose.xlu0.b32.cont [2/16] 0.0, 128
        %1109 = vxpose.xlu0.b32.cont [3/16] 0.0, 128
        %1110 = vxpose.xlu0.b32.cont [4/16] 0.0, 128
        %1111 = vxpose.xlu0.b32.cont [5/16] 0.0, 128
        %1112 = vxpose.xlu0.b32.cont [6/16] 0.0, 128
        %1113 = vxpose.xlu0.b32.cont [7/16] 0.0, 128
        %1114 = vxpose.xlu0.b32.cont [8/16] 0.0, 128
        %1115 = vxpose.xlu0.b32.cont [9/16] 0.0, 128
        %1116 = vxpose.xlu0.b32.cont [10/16] 0.0, 128
        %1117 = vxpose.xlu0.b32.cont [11/16] 0.0, 128
        %1118 = vxpose.xlu0.b32.cont [12/16] 0.0, 128
        %1119 = vxpose.xlu0.b32.cont [13/16] 0.0, 128
        %1120 = vxpose.xlu0.b32.cont [14/16] 0.0, 128
        %1121 = vxpose.xlu0.b32.cont [15/16] 0.0, 128
        %1122 = vxpose.xlu0.b32.end [16/16] 0.0, 128
        %v1123 = vpop.trf.xlu0
        %v1124 = vpop.trf.xlu0
        %v1125 = vpop.trf.xlu0
        %v1126 = vpop.trf.xlu0
        %v1127 = vpop.trf.xlu0
        %v1128 = vpop.trf.xlu0
        %v1129 = vpop.trf.xlu0
        %v1130 = vpop.trf.xlu0
        %v1131 = vpop.trf.xlu0
        %v1132 = vpop.trf.xlu0
        %v1133 = vpop.trf.xlu0
        %v1134 = vpop.trf.xlu0
        %v1135 = vpop.trf.xlu0
        %v1136 = vpop.trf.xlu0
        %v1137 = vpop.trf.xlu0
        %v1138 = vpop.trf.xlu0
        %1139 = vxpose.xlu0.b32.start [1/16] %v1089, 128
        %1140 = vxpose.xlu0.b32.cont [2/16] 0.0, 128
        %1141 = vxpose.xlu0.b32.cont [3/16] 0.0, 128
        %1142 = vxpose.xlu0.b32.cont [4/16] 0.0, 128
        %1143 = vxpose.xlu0.b32.cont [5/16] 0.0, 128
        %1144 = vxpose.xlu0.b32.cont [6/16] 0.0, 128
        %1145 = vxpose.xlu0.b32.cont [7/16] 0.0, 128
        %1146 = vxpose.xlu0.b32.cont [8/16] 0.0, 128
        %1147 = vxpose.xlu0.b32.cont [9/16] 0.0, 128
        %1148 = vxpose.xlu0.b32.cont [10/16] 0.0, 128
        %1149 = vxpose.xlu0.b32.cont [11/16] 0.0, 128
        %1150 = vxpose.xlu0.b32.cont [12/16] 0.0, 128
        %1151 = vxpose.xlu0.b32.cont [13/16] 0.0, 128
        %1152 = vxpose.xlu0.b32.cont [14/16] 0.0, 128
        %1153 = vxpose.xlu0.b32.cont [15/16] 0.0, 128
        %1154 = vxpose.xlu0.b32.end [16/16] 0.0, 128
        %v1155 = vpop.trf.xlu0
        %v1156 = vpop.trf.xlu0
        %v1157 = vpop.trf.xlu0
        %v1158 = vpop.trf.xlu0
        %v1159 = vpop.trf.xlu0
        %v1160 = vpop.trf.xlu0
        %v1161 = vpop.trf.xlu0
        %v1162 = vpop.trf.xlu0
        %v1163 = vpop.trf.xlu0
        %v1164 = vpop.trf.xlu0
        %v1165 = vpop.trf.xlu0
        %v1166 = vpop.trf.xlu0
        %v1167 = vpop.trf.xlu0
        %v1168 = vpop.trf.xlu0
        %v1169 = vpop.trf.xlu0
        %v1170 = vpop.trf.xlu0
        %1171 = vxpose.xlu0.b32.start [1/16] %v1092, 128
        %1172 = vxpose.xlu0.b32.cont [2/16] 0.0, 128
        %1173 = vxpose.xlu0.b32.cont [3/16] 0.0, 128
        %1174 = vxpose.xlu0.b32.cont [4/16] 0.0, 128
        %1175 = vxpose.xlu0.b32.cont [5/16] 0.0, 128
        %1176 = vxpose.xlu0.b32.cont [6/16] 0.0, 128
        %1177 = vxpose.xlu0.b32.cont [7/16] 0.0, 128
        %1178 = vxpose.xlu0.b32.cont [8/16] 0.0, 128
        %1179 = vxpose.xlu0.b32.cont [9/16] 0.0, 128
        %1180 = vxpose.xlu0.b32.cont [10/16] 0.0, 128
        %1181 = vxpose.xlu0.b32.cont [11/16] 0.0, 128
        %1182 = vxpose.xlu0.b32.cont [12/16] 0.0, 128
        %1183 = vxpose.xlu0.b32.cont [13/16] 0.0, 128
        %1184 = vxpose.xlu0.b32.cont [14/16] 0.0, 128
        %1185 = vxpose.xlu0.b32.cont [15/16] 0.0, 128
        %1186 = vxpose.xlu0.b32.end [16/16] 0.0, 128
        %v1187 = vpop.trf.xlu0
        %v1188 = vpop.trf.xlu0
        %v1189 = vpop.trf.xlu0
        %v1190 = vpop.trf.xlu0
        %v1191 = vpop.trf.xlu0
        %v1192 = vpop.trf.xlu0
        %v1193 = vpop.trf.xlu0
        %v1194 = vpop.trf.xlu0
        %v1195 = vpop.trf.xlu0
        %v1196 = vpop.trf.xlu0
        %v1197 = vpop.trf.xlu0
        %v1198 = vpop.trf.xlu0
        %v1199 = vpop.trf.xlu0
        %v1200 = vpop.trf.xlu0
        %v1201 = vpop.trf.xlu0
        %v1202 = vpop.trf.xlu0
        %1203 = vxpose.xlu0.b32.start [1/16] %v1095, 128
        %1204 = vxpose.xlu0.b32.cont [2/16] 0.0, 128
        %1205 = vxpose.xlu0.b32.cont [3/16] 0.0, 128
        %1206 = vxpose.xlu0.b32.cont [4/16] 0.0, 128
        %1207 = vxpose.xlu0.b32.cont [5/16] 0.0, 128
        %1208 = vxpose.xlu0.b32.cont [6/16] 0.0, 128
        %1209 = vxpose.xlu0.b32.cont [7/16] 0.0, 128
        %1210 = vxpose.xlu0.b32.cont [8/16] 0.0, 128
        %1211 = vxpose.xlu0.b32.cont [9/16] 0.0, 128
        %1212 = vxpose.xlu0.b32.cont [10/16] 0.0, 128
        %1213 = vxpose.xlu0.b32.cont [11/16] 0.0, 128
        %1214 = vxpose.xlu0.b32.cont [12/16] 0.0, 128
        %1215 = vxpose.xlu0.b32.cont [13/16] 0.0, 128
        %1216 = vxpose.xlu0.b32.cont [14/16] 0.0, 128
        %1217 = vxpose.xlu0.b32.cont [15/16] 0.0, 128
        %1218 = vxpose.xlu0.b32.end [16/16] 0.0, 128
        %v1219 = vpop.trf.xlu0
        %v1220 = vpop.trf.xlu0
        %v1221 = vpop.trf.xlu0
        %v1222 = vpop.trf.xlu0
        %v1223 = vpop.trf.xlu0
        %v1224 = vpop.trf.xlu0
        %v1225 = vpop.trf.xlu0
        %v1226 = vpop.trf.xlu0
        %v1227 = vpop.trf.xlu0
        %v1228 = vpop.trf.xlu0
        %v1229 = vpop.trf.xlu0
        %v1230 = vpop.trf.xlu0
        %v1231 = vpop.trf.xlu0
        %v1232 = vpop.trf.xlu0
        %v1233 = vpop.trf.xlu0
        %v1234 = vpop.trf.xlu0
        %vm1235 = vcmask 261120
        %v1236 = vsel %vm1235, %v1038, 0
        %1238 = vmatpush.msra.mxu0 0.0
        %1239 = vmatpush.msra.mxu0 0.0
        %1240 = vmatpush.msra.mxu0 0.0
        %1241 = vmatpush.msra.mxu0 0.0
        %1242 = vmatpush.msra.mxu0 0.0
        %1243 = vmatpush.msra.mxu0 0.0
        %1244 = vmatpush.msra.mxu0 0.0
        %1245 = vmatpush.msra.mxu0 0.0
        %1246 = vmatpush.msra.mxu0 0.0
        %1247 = vmatpush.msra.mxu0 0.0
        %1248 = vmatpush.msra.mxu0 0.0
        %1249 = vmatpush.msra.mxu0 0.0
        %1250 = vmatpush.msra.mxu0 %v1126
        %1251 = vmatpush.msra.mxu0 %v1125
        %1252 = vmatpush.msra.mxu0 %v1124
        %1253 = vmatpush.msra.mxu0 %v1123
        %1254 = vmatmul.f32.gmra.mxu0 %v1236
        %v1255 = vpop.f32.mrf.mxu0
        %v1256 = vadd.f32 0.0, %v1255
        %1257 = vdwg.mxu0
        %v1258 = vsel %vm1235, %v1082, 0
        %1260 = vmatpush.msra.mxu0 0.0
        %1261 = vmatpush.msra.mxu0 0.0
        %1262 = vmatpush.msra.mxu0 0.0
        %1263 = vmatpush.msra.mxu0 0.0
        %1264 = vmatpush.msra.mxu0 0.0
        %1265 = vmatpush.msra.mxu0 0.0
        %1266 = vmatpush.msra.mxu0 0.0
        %1267 = vmatpush.msra.mxu0 0.0
        %1268 = vmatpush.msra.mxu0 0.0
        %1269 = vmatpush.msra.mxu0 0.0
        %1270 = vmatpush.msra.mxu0 0.0
        %1271 = vmatpush.msra.mxu0 0.0
        %1272 = vmatpush.msra.mxu0 %v1158
        %1273 = vmatpush.msra.mxu0 %v1157
        %1274 = vmatpush.msra.mxu0 %v1156
        %1275 = vmatpush.msra.mxu0 %v1155
        %1276 = vmatmul.f32.gmra.mxu0 %v1258
        %v1277 = vpop.f32.mrf.mxu0
        %v1278 = vadd.f32 0.0, %v1277
        %1279 = vdwg.mxu0
        %v1280 = vsel %vm1235, %v1084, 0
        %1282 = vmatpush.msra.mxu0 0.0
        %1283 = vmatpush.msra.mxu0 0.0
        %1284 = vmatpush.msra.mxu0 0.0
        %1285 = vmatpush.msra.mxu0 0.0
        %1286 = vmatpush.msra.mxu0 0.0
        %1287 = vmatpush.msra.mxu0 0.0
        %1288 = vmatpush.msra.mxu0 0.0
        %1289 = vmatpush.msra.mxu0 0.0
        %1290 = vmatpush.msra.mxu0 0.0
        %1291 = vmatpush.msra.mxu0 0.0
        %1292 = vmatpush.msra.mxu0 0.0
        %1293 = vmatpush.msra.mxu0 0.0
        %1294 = vmatpush.msra.mxu0 %v1190
        %1295 = vmatpush.msra.mxu0 %v1189
        %1296 = vmatpush.msra.mxu0 %v1188
        %1297 = vmatpush.msra.mxu0 %v1187
        %1298 = vmatmul.f32.gmra.mxu0 %v1280
        %v1299 = vpop.f32.mrf.mxu0
        %v1300 = vadd.f32 0.0, %v1299
        %1301 = vdwg.mxu0
        %v1302 = vsel %vm1235, %v1086, 0
        %1304 = vmatpush.msra.mxu0 0.0
        %1305 = vmatpush.msra.mxu0 0.0
        %1306 = vmatpush.msra.mxu0 0.0
        %1307 = vmatpush.msra.mxu0 0.0
        %1308 = vmatpush.msra.mxu0 0.0
        %1309 = vmatpush.msra.mxu0 0.0
        %1310 = vmatpush.msra.mxu0 0.0
        %1311 = vmatpush.msra.mxu0 0.0
        %1312 = vmatpush.msra.mxu0 0.0
        %1313 = vmatpush.msra.mxu0 0.0
        %1314 = vmatpush.msra.mxu0 0.0
        %1315 = vmatpush.msra.mxu0 0.0
        %1316 = vmatpush.msra.mxu0 %v1222
        %1317 = vmatpush.msra.mxu0 %v1221
        %1318 = vmatpush.msra.mxu0 %v1220
        %1319 = vmatpush.msra.mxu0 %v1219
        %1320 = vmatmul.f32.gmra.mxu0 %v1302
        %v1321 = vpop.f32.mrf.mxu0
        %v1322 = vadd.f32 0.0, %v1321
        %1323 = vdwg.mxu0
        %v1324 = vmul.f32 %v1256, 0.35355338
        %v1325 = vmul.f32 %v1278, 0.35355338
        %v1326 = vmul.f32 %v1300, 0.35355338
        %v1327 = vmul.f32 %v1322, 0.35355338
        %v1328 = vsel %vm911, 1, 0
        %v1329 = vperm.slane %v1328, 0
        %vm1330 = vcmp.eq.s32.totalorder %v1329, 1
        %v1331 = vsel %vm1330, -1e+09, %v1324
        %v1332 = vsel %vm1330, -1e+09, %v1325
        %v1333 = vsel %vm1330, -1e+09, %v1326
        %v1334 = vsel %vm1330, -1e+09, %v1327
        %vm1335 = vcmask 64512
        %v1336 = vsel %vm1335, %v1331, -inf
        %1337 = vmax.xlane.f32.xlu0 %v1336
        %v1338 = vpop.xlane.xlu0 %1337
        %v1339 = vsel %vm1335, %v1332, -inf
        %1340 = vmax.xlane.f32.xlu0 %v1339
        %v1341 = vpop.xlane.xlu0 %1340
        %v1342 = vsel %vm1335, %v1333, -inf
        %1343 = vmax.xlane.f32.xlu0 %v1342
        %v1344 = vpop.xlane.xlu0 %1343
        %v1345 = vsel %vm1335, %v1334, -inf
        %1346 = vmax.xlane.f32.xlu0 %v1345
        %v1347 = vpop.xlane.xlu0 %1346
        %v1348 = vsub.f32 %v1331, %v1338
        %v1349 = vsub.f32 %v1332, %v1341
        %v1350 = vsub.f32 %v1333, %v1344
        %v1351 = vsub.f32 %v1334, %v1347
        %v1352 = vmul.f32 %v1348, 1.442695
        %v1353 = vpow.pop %v1352
        %v1354 = vmul.f32 %v1349, 1.442695
        %v1355 = vpow.pop %v1354
        %v1356 = vmul.f32 %v1350, 1.442695
        %v1357 = vpow.pop %v1356
        %v1358 = vmul.f32 %v1351, 1.442695
        %v1359 = vpow.pop %v1358
        %v1360 = vsel %vm1335, %v1353, 0.0
        %1361 = vadd.xlane.f32.xlu0 %v1360
        %v1362 = vpop.xlane.xlu0 %1361
        %v1363 = vsel %vm1335, %v1355, 0.0
        %1364 = vadd.xlane.f32.xlu0 %v1363
        %v1365 = vpop.xlane.xlu0 %1364
        %v1366 = vsel %vm1335, %v1357, 0.0
        %1367 = vadd.xlane.f32.xlu0 %v1366
        %v1368 = vpop.xlane.xlu0 %1367
        %v1369 = vsel %vm1335, %v1359, 0.0
        %1370 = vadd.xlane.f32.xlu0 %v1369
        %v1371 = vpop.xlane.xlu0 %1370
        %v1372 = vrcp.pop %v1362
        %v1373 = vrcp.pop %v1365
        %v1374 = vrcp.pop %v1368
        %v1375 = vrcp.pop %v1371
        %v1376 = vmul.f32 %v1353, %v1372
        %v1377 = vmul.f32 %v1355, %v1373
        %v1378 = vmul.f32 %v1357, %v1374
        %v1379 = vmul.f32 %v1359, %v1375
        %1380 = vxpose.xlu0.b32.start [1/16] %v1078, 128
        %1381 = vxpose.xlu0.b32.cont [2/16] 0.0, 128
        %1382 = vxpose.xlu0.b32.cont [3/16] 0.0, 128
        %1383 = vxpose.xlu0.b32.cont [4/16] 0.0, 128
        %1384 = vxpose.xlu0.b32.cont [5/16] 0.0, 128
        %1385 = vxpose.xlu0.b32.cont [6/16] 0.0, 128
        %1386 = vxpose.xlu0.b32.cont [7/16] 0.0, 128
        %1387 = vxpose.xlu0.b32.cont [8/16] 0.0, 128
        %1388 = vxpose.xlu0.b32.cont [9/16] 0.0, 128
        %1389 = vxpose.xlu0.b32.cont [10/16] 0.0, 128
        %1390 = vxpose.xlu0.b32.cont [11/16] 0.0, 128
        %1391 = vxpose.xlu0.b32.cont [12/16] 0.0, 128
        %1392 = vxpose.xlu0.b32.cont [13/16] 0.0, 128
        %1393 = vxpose.xlu0.b32.cont [14/16] 0.0, 128
        %1394 = vxpose.xlu0.b32.cont [15/16] 0.0, 128
        %1395 = vxpose.xlu0.b32.end [16/16] 0.0, 128
        %v1396 = vpop.trf.xlu0
        %v1397 = vpop.trf.xlu0
        %v1398 = vpop.trf.xlu0
        %v1399 = vpop.trf.xlu0
        %v1400 = vpop.trf.xlu0
        %v1401 = vpop.trf.xlu0
        %v1402 = vpop.trf.xlu0
        %v1403 = vpop.trf.xlu0
        %v1404 = vpop.trf.xlu0
        %v1405 = vpop.trf.xlu0
        %v1406 = vpop.trf.xlu0
        %v1407 = vpop.trf.xlu0
        %v1408 = vpop.trf.xlu0
        %v1409 = vpop.trf.xlu0
        %v1410 = vpop.trf.xlu0
        %v1411 = vpop.trf.xlu0
        %1412 = vxpose.xlu0.b32.start [1/16] %v1099, 128
        %1413 = vxpose.xlu0.b32.cont [2/16] 0.0, 128
        %1414 = vxpose.xlu0.b32.cont [3/16] 0.0, 128
        %1415 = vxpose.xlu0.b32.cont [4/16] 0.0, 128
        %1416 = vxpose.xlu0.b32.cont [5/16] 0.0, 128
        %1417 = vxpose.xlu0.b32.cont [6/16] 0.0, 128
        %1418 = vxpose.xlu0.b32.cont [7/16] 0.0, 128
        %1419 = vxpose.xlu0.b32.cont [8/16] 0.0, 128
        %1420 = vxpose.xlu0.b32.cont [9/16] 0.0, 128
        %1421 = vxpose.xlu0.b32.cont [10/16] 0.0, 128
        %1422 = vxpose.xlu0.b32.cont [11/16] 0.0, 128
        %1423 = vxpose.xlu0.b32.cont [12/16] 0.0, 128
        %1424 = vxpose.xlu0.b32.cont [13/16] 0.0, 128
        %1425 = vxpose.xlu0.b32.cont [14/16] 0.0, 128
        %1426 = vxpose.xlu0.b32.cont [15/16] 0.0, 128
        %1427 = vxpose.xlu0.b32.end [16/16] 0.0, 128
        %v1428 = vpop.trf.xlu0
        %v1429 = vpop.trf.xlu0
        %v1430 = vpop.trf.xlu0
        %v1431 = vpop.trf.xlu0
        %v1432 = vpop.trf.xlu0
        %v1433 = vpop.trf.xlu0
        %v1434 = vpop.trf.xlu0
        %v1435 = vpop.trf.xlu0
        %v1436 = vpop.trf.xlu0
        %v1437 = vpop.trf.xlu0
        %v1438 = vpop.trf.xlu0
        %v1439 = vpop.trf.xlu0
        %v1440 = vpop.trf.xlu0
        %v1441 = vpop.trf.xlu0
        %v1442 = vpop.trf.xlu0
        %v1443 = vpop.trf.xlu0
        %1444 = vxpose.xlu0.b32.start [1/16] %v1102, 128
        %1445 = vxpose.xlu0.b32.cont [2/16] 0.0, 128
        %1446 = vxpose.xlu0.b32.cont [3/16] 0.0, 128
        %1447 = vxpose.xlu0.b32.cont [4/16] 0.0, 128
        %1448 = vxpose.xlu0.b32.cont [5/16] 0.0, 128
        %1449 = vxpose.xlu0.b32.cont [6/16] 0.0, 128
        %1450 = vxpose.xlu0.b32.cont [7/16] 0.0, 128
        %1451 = vxpose.xlu0.b32.cont [8/16] 0.0, 128
        %1452 = vxpose.xlu0.b32.cont [9/16] 0.0, 128
        %1453 = vxpose.xlu0.b32.cont [10/16] 0.0, 128
        %1454 = vxpose.xlu0.b32.cont [11/16] 0.0, 128
        %1455 = vxpose.xlu0.b32.cont [12/16] 0.0, 128
        %1456 = vxpose.xlu0.b32.cont [13/16] 0.0, 128
        %1457 = vxpose.xlu0.b32.cont [14/16] 0.0, 128
        %1458 = vxpose.xlu0.b32.cont [15/16] 0.0, 128
        %1459 = vxpose.xlu0.b32.end [16/16] 0.0, 128
        %v1460 = vpop.trf.xlu0
        %v1461 = vpop.trf.xlu0
        %v1462 = vpop.trf.xlu0
        %v1463 = vpop.trf.xlu0
        %v1464 = vpop.trf.xlu0
        %v1465 = vpop.trf.xlu0
        %v1466 = vpop.trf.xlu0
        %v1467 = vpop.trf.xlu0
        %v1468 = vpop.trf.xlu0
        %v1469 = vpop.trf.xlu0
        %v1470 = vpop.trf.xlu0
        %v1471 = vpop.trf.xlu0
        %v1472 = vpop.trf.xlu0
        %v1473 = vpop.trf.xlu0
        %v1474 = vpop.trf.xlu0
        %v1475 = vpop.trf.xlu0
        %1476 = vxpose.xlu0.b32.start [1/16] %v1105, 128
        %1477 = vxpose.xlu0.b32.cont [2/16] 0.0, 128
        %1478 = vxpose.xlu0.b32.cont [3/16] 0.0, 128
        %1479 = vxpose.xlu0.b32.cont [4/16] 0.0, 128
        %1480 = vxpose.xlu0.b32.cont [5/16] 0.0, 128
        %1481 = vxpose.xlu0.b32.cont [6/16] 0.0, 128
        %1482 = vxpose.xlu0.b32.cont [7/16] 0.0, 128
        %1483 = vxpose.xlu0.b32.cont [8/16] 0.0, 128
        %1484 = vxpose.xlu0.b32.cont [9/16] 0.0, 128
        %1485 = vxpose.xlu0.b32.cont [10/16] 0.0, 128
        %1486 = vxpose.xlu0.b32.cont [11/16] 0.0, 128
        %1487 = vxpose.xlu0.b32.cont [12/16] 0.0, 128
        %1488 = vxpose.xlu0.b32.cont [13/16] 0.0, 128
        %1489 = vxpose.xlu0.b32.cont [14/16] 0.0, 128
        %1490 = vxpose.xlu0.b32.cont [15/16] 0.0, 128
        %1491 = vxpose.xlu0.b32.end [16/16] 0.0, 128
        %v1492 = vpop.trf.xlu0
        %v1493 = vpop.trf.xlu0
        %v1494 = vpop.trf.xlu0
        %v1495 = vpop.trf.xlu0
        %v1496 = vpop.trf.xlu0
        %v1497 = vpop.trf.xlu0
        %v1498 = vpop.trf.xlu0
        %v1499 = vpop.trf.xlu0
        %v1500 = vpop.trf.xlu0
        %v1501 = vpop.trf.xlu0
        %v1502 = vpop.trf.xlu0
        %v1503 = vpop.trf.xlu0
        %v1504 = vpop.trf.xlu0
        %v1505 = vpop.trf.xlu0
        %v1506 = vpop.trf.xlu0
        %v1507 = vpop.trf.xlu0
        %v1509 = vsel %vm1335, %v1396, 0
        %v1512 = vsel %vm1335, %v1397, 0
        %v1515 = vsel %vm1335, %v1398, 0
        %v1518 = vsel %vm1335, %v1399, 0
        %v1521 = vsel %vm1335, %v1376, 0
        %1523 = vmatpush.xpose.msra.mxu0 0.0
        %1524 = vmatpush.xpose.msra.mxu0 0.0
        %1525 = vmatpush.xpose.msra.mxu0 0.0
        %1526 = vmatpush.xpose.msra.mxu0 0.0
        %1527 = vmatpush.xpose.msra.mxu0 0.0
        %1528 = vmatpush.xpose.msra.mxu0 0.0
        %1529 = vmatpush.xpose.msra.mxu0 0.0
        %1530 = vmatpush.xpose.msra.mxu0 0.0
        %1531 = vmatpush.xpose.msra.mxu0 0.0
        %1532 = vmatpush.xpose.msra.mxu0 0.0
        %1533 = vmatpush.xpose.msra.mxu0 0.0
        %1534 = vmatpush.xpose.msra.mxu0 0.0
        %1535 = vmatpush.xpose.msra.mxu0 0.0
        %1536 = vmatpush.xpose.msra.mxu0 0.0
        %1537 = vmatpush.xpose.msra.mxu0 0.0
        %1538 = vmatpush.xpose.msra.mxu0 %v1521
        %1539 = vmatmul.f32.gmra.mxu0 %v1509
        %v1540 = vpop.f32.mrf.mxu0
        %v1541 = vadd.f32 0.0, %v1540
        %1542 = vmatmul.f32.gmra.mxu0 %v1512
        %v1543 = vpop.f32.mrf.mxu0
        %v1544 = vadd.f32 0.0, %v1543
        %1545 = vmatmul.f32.gmra.mxu0 %v1515
        %v1546 = vpop.f32.mrf.mxu0
        %v1547 = vadd.f32 0.0, %v1546
        %1548 = vmatmul.f32.gmra.mxu0 %v1518
        %v1549 = vpop.f32.mrf.mxu0
        %v1550 = vadd.f32 0.0, %v1549
        %1551 = vdwg.mxu0
        %v1553 = vsel %vm1335, %v1428, 0
        %v1556 = vsel %vm1335, %v1429, 0
        %v1559 = vsel %vm1335, %v1430, 0
        %v1562 = vsel %vm1335, %v1431, 0
        %v1565 = vsel %vm1335, %v1377, 0
        %1567 = vmatpush.xpose.msra.mxu0 0.0
        %1568 = vmatpush.xpose.msra.mxu0 0.0
        %1569 = vmatpush.xpose.msra.mxu0 0.0
        %1570 = vmatpush.xpose.msra.mxu0 0.0
        %1571 = vmatpush.xpose.msra.mxu0 0.0
        %1572 = vmatpush.xpose.msra.mxu0 0.0
        %1573 = vmatpush.xpose.msra.mxu0 0.0
        %1574 = vmatpush.xpose.msra.mxu0 0.0
        %1575 = vmatpush.xpose.msra.mxu0 0.0
        %1576 = vmatpush.xpose.msra.mxu0 0.0
        %1577 = vmatpush.xpose.msra.mxu0 0.0
        %1578 = vmatpush.xpose.msra.mxu0 0.0
        %1579 = vmatpush.xpose.msra.mxu0 0.0
        %1580 = vmatpush.xpose.msra.mxu0 0.0
        %1581 = vmatpush.xpose.msra.mxu0 0.0
        %1582 = vmatpush.xpose.msra.mxu0 %v1565
        %1583 = vmatmul.f32.gmra.mxu0 %v1553
        %v1584 = vpop.f32.mrf.mxu0
        %v1585 = vadd.f32 0.0, %v1584
        %1586 = vmatmul.f32.gmra.mxu0 %v1556
        %v1587 = vpop.f32.mrf.mxu0
        %v1588 = vadd.f32 0.0, %v1587
        %1589 = vmatmul.f32.gmra.mxu0 %v1559
        %v1590 = vpop.f32.mrf.mxu0
        %v1591 = vadd.f32 0.0, %v1590
        %1592 = vmatmul.f32.gmra.mxu0 %v1562
        %v1593 = vpop.f32.mrf.mxu0
        %v1594 = vadd.f32 0.0, %v1593
        %1595 = vdwg.mxu0
        %v1597 = vsel %vm1335, %v1460, 0
        %v1600 = vsel %vm1335, %v1461, 0
        %v1603 = vsel %vm1335, %v1462, 0
        %v1606 = vsel %vm1335, %v1463, 0
        %v1609 = vsel %vm1335, %v1378, 0
        %1611 = vmatpush.xpose.msra.mxu0 0.0
        %1612 = vmatpush.xpose.msra.mxu0 0.0
        %1613 = vmatpush.xpose.msra.mxu0 0.0
        %1614 = vmatpush.xpose.msra.mxu0 0.0
        %1615 = vmatpush.xpose.msra.mxu0 0.0
        %1616 = vmatpush.xpose.msra.mxu0 0.0
        %1617 = vmatpush.xpose.msra.mxu0 0.0
        %1618 = vmatpush.xpose.msra.mxu0 0.0
        %1619 = vmatpush.xpose.msra.mxu0 0.0
        %1620 = vmatpush.xpose.msra.mxu0 0.0
        %1621 = vmatpush.xpose.msra.mxu0 0.0
        %1622 = vmatpush.xpose.msra.mxu0 0.0
        %1623 = vmatpush.xpose.msra.mxu0 0.0
        %1624 = vmatpush.xpose.msra.mxu0 0.0
        %1625 = vmatpush.xpose.msra.mxu0 0.0
        %1626 = vmatpush.xpose.msra.mxu0 %v1609
        %1627 = vmatmul.f32.gmra.mxu0 %v1597
        %v1628 = vpop.f32.mrf.mxu0
        %v1629 = vadd.f32 0.0, %v1628
        %1630 = vmatmul.f32.gmra.mxu0 %v1600
        %v1631 = vpop.f32.mrf.mxu0
        %v1632 = vadd.f32 0.0, %v1631
        %1633 = vmatmul.f32.gmra.mxu0 %v1603
        %v1634 = vpop.f32.mrf.mxu0
        %v1635 = vadd.f32 0.0, %v1634
        %1636 = vmatmul.f32.gmra.mxu0 %v1606
        %v1637 = vpop.f32.mrf.mxu0
        %v1638 = vadd.f32 0.0, %v1637
        %1639 = vdwg.mxu0
        %v1641 = vsel %vm1335, %v1492, 0
        %v1644 = vsel %vm1335, %v1493, 0
        %v1647 = vsel %vm1335, %v1494, 0
        %v1650 = vsel %vm1335, %v1495, 0
        %v1653 = vsel %vm1335, %v1379, 0
        %1655 = vmatpush.xpose.msra.mxu0 0.0
        %1656 = vmatpush.xpose.msra.mxu0 0.0
        %1657 = vmatpush.xpose.msra.mxu0 0.0
        %1658 = vmatpush.xpose.msra.mxu0 0.0
        %1659 = vmatpush.xpose.msra.mxu0 0.0
        %1660 = vmatpush.xpose.msra.mxu0 0.0
        %1661 = vmatpush.xpose.msra.mxu0 0.0
        %1662 = vmatpush.xpose.msra.mxu0 0.0
        %1663 = vmatpush.xpose.msra.mxu0 0.0
        %1664 = vmatpush.xpose.msra.mxu0 0.0
        %1665 = vmatpush.xpose.msra.mxu0 0.0
        %1666 = vmatpush.xpose.msra.mxu0 0.0
        %1667 = vmatpush.xpose.msra.mxu0 0.0
        %1668 = vmatpush.xpose.msra.mxu0 0.0
        %1669 = vmatpush.xpose.msra.mxu0 0.0
        %1670 = vmatpush.xpose.msra.mxu0 %v1653
        %1671 = vmatmul.f32.gmra.mxu0 %v1641
        %v1672 = vpop.f32.mrf.mxu0
        %v1673 = vadd.f32 0.0, %v1672
        %1674 = vmatmul.f32.gmra.mxu0 %v1644
        %v1675 = vpop.f32.mrf.mxu0
        %v1676 = vadd.f32 0.0, %v1675
        %1677 = vmatmul.f32.gmra.mxu0 %v1647
        %v1678 = vpop.f32.mrf.mxu0
        %v1679 = vadd.f32 0.0, %v1678
        %1680 = vmatmul.f32.gmra.mxu0 %v1650
        %v1681 = vpop.f32.mrf.mxu0
        %v1682 = vadd.f32 0.0, %v1681
        %1683 = vdwg.mxu0
        %1684 = vxpose.xlu0.b32.start [1/16] %v1541, 128
        %1685 = vxpose.xlu0.b32.cont [2/16] %v1544, 128
        %1686 = vxpose.xlu0.b32.cont [3/16] %v1547, 128
        %1687 = vxpose.xlu0.b32.cont [4/16] %v1550, 128
        %1688 = vxpose.xlu0.b32.cont [5/16] 0.0, 128
        %1689 = vxpose.xlu0.b32.cont [6/16] 0.0, 128
        %1690 = vxpose.xlu0.b32.cont [7/16] 0.0, 128
        %1691 = vxpose.xlu0.b32.cont [8/16] 0.0, 128
        %1692 = vxpose.xlu0.b32.cont [9/16] 0.0, 128
        %1693 = vxpose.xlu0.b32.cont [10/16] 0.0, 128
        %1694 = vxpose.xlu0.b32.cont [11/16] 0.0, 128
        %1695 = vxpose.xlu0.b32.cont [12/16] 0.0, 128
        %1696 = vxpose.xlu0.b32.cont [13/16] 0.0, 128
        %1697 = vxpose.xlu0.b32.cont [14/16] 0.0, 128
        %1698 = vxpose.xlu0.b32.cont [15/16] 0.0, 128
        %1699 = vxpose.xlu0.b32.end [16/16] 0.0, 128
        %v1700 = vpop.trf.xlu0
        %v1701 = vpop.trf.xlu0
        %v1702 = vpop.trf.xlu0
        %v1703 = vpop.trf.xlu0
        %v1704 = vpop.trf.xlu0
        %v1705 = vpop.trf.xlu0
        %v1706 = vpop.trf.xlu0
        %v1707 = vpop.trf.xlu0
        %v1708 = vpop.trf.xlu0
        %v1709 = vpop.trf.xlu0
        %v1710 = vpop.trf.xlu0
        %v1711 = vpop.trf.xlu0
        %v1712 = vpop.trf.xlu0
        %v1713 = vpop.trf.xlu0
        %v1714 = vpop.trf.xlu0
        %v1715 = vpop.trf.xlu0
        %1716 = vxpose.xlu0.b32.start [1/16] %v1585, 128
        %1717 = vxpose.xlu0.b32.cont [2/16] %v1588, 128
        %1718 = vxpose.xlu0.b32.cont [3/16] %v1591, 128
        %1719 = vxpose.xlu0.b32.cont [4/16] %v1594, 128
        %1720 = vxpose.xlu0.b32.cont [5/16] 0.0, 128
        %1721 = vxpose.xlu0.b32.cont [6/16] 0.0, 128
        %1722 = vxpose.xlu0.b32.cont [7/16] 0.0, 128
        %1723 = vxpose.xlu0.b32.cont [8/16] 0.0, 128
        %1724 = vxpose.xlu0.b32.cont [9/16] 0.0, 128
        %1725 = vxpose.xlu0.b32.cont [10/16] 0.0, 128
        %1726 = vxpose.xlu0.b32.cont [11/16] 0.0, 128
        %1727 = vxpose.xlu0.b32.cont [12/16] 0.0, 128
        %1728 = vxpose.xlu0.b32.cont [13/16] 0.0, 128
        %1729 = vxpose.xlu0.b32.cont [14/16] 0.0, 128
        %1730 = vxpose.xlu0.b32.cont [15/16] 0.0, 128
        %1731 = vxpose.xlu0.b32.end [16/16] 0.0, 128
        %v1732 = vpop.trf.xlu0
        %v1733 = vpop.trf.xlu0
        %v1734 = vpop.trf.xlu0
        %v1735 = vpop.trf.xlu0
        %v1736 = vpop.trf.xlu0
        %v1737 = vpop.trf.xlu0
        %v1738 = vpop.trf.xlu0
        %v1739 = vpop.trf.xlu0
        %v1740 = vpop.trf.xlu0
        %v1741 = vpop.trf.xlu0
        %v1742 = vpop.trf.xlu0
        %v1743 = vpop.trf.xlu0
        %v1744 = vpop.trf.xlu0
        %v1745 = vpop.trf.xlu0
        %v1746 = vpop.trf.xlu0
        %v1747 = vpop.trf.xlu0
        %1748 = vxpose.xlu0.b32.start [1/16] %v1629, 128
        %1749 = vxpose.xlu0.b32.cont [2/16] %v1632, 128
        %1750 = vxpose.xlu0.b32.cont [3/16] %v1635, 128
        %1751 = vxpose.xlu0.b32.cont [4/16] %v1638, 128
        %1752 = vxpose.xlu0.b32.cont [5/16] 0.0, 128
        %1753 = vxpose.xlu0.b32.cont [6/16] 0.0, 128
        %1754 = vxpose.xlu0.b32.cont [7/16] 0.0, 128
        %1755 = vxpose.xlu0.b32.cont [8/16] 0.0, 128
        %1756 = vxpose.xlu0.b32.cont [9/16] 0.0, 128
        %1757 = vxpose.xlu0.b32.cont [10/16] 0.0, 128
        %1758 = vxpose.xlu0.b32.cont [11/16] 0.0, 128
        %1759 = vxpose.xlu0.b32.cont [12/16] 0.0, 128
        %1760 = vxpose.xlu0.b32.cont [13/16] 0.0, 128
        %1761 = vxpose.xlu0.b32.cont [14/16] 0.0, 128
        %1762 = vxpose.xlu0.b32.cont [15/16] 0.0, 128
        %1763 = vxpose.xlu0.b32.end [16/16] 0.0, 128
        %v1764 = vpop.trf.xlu0
        %v1765 = vpop.trf.xlu0
        %v1766 = vpop.trf.xlu0
        %v1767 = vpop.trf.xlu0
        %v1768 = vpop.trf.xlu0
        %v1769 = vpop.trf.xlu0
        %v1770 = vpop.trf.xlu0
        %v1771 = vpop.trf.xlu0
        %v1772 = vpop.trf.xlu0
        %v1773 = vpop.trf.xlu0
        %v1774 = vpop.trf.xlu0
        %v1775 = vpop.trf.xlu0
        %v1776 = vpop.trf.xlu0
        %v1777 = vpop.trf.xlu0
        %v1778 = vpop.trf.xlu0
        %v1779 = vpop.trf.xlu0
        %1780 = vxpose.xlu0.b32.start [1/16] %v1673, 128
        %1781 = vxpose.xlu0.b32.cont [2/16] %v1676, 128
        %1782 = vxpose.xlu0.b32.cont [3/16] %v1679, 128
        %1783 = vxpose.xlu0.b32.cont [4/16] %v1682, 128
        %1784 = vxpose.xlu0.b32.cont [5/16] 0.0, 128
        %1785 = vxpose.xlu0.b32.cont [6/16] 0.0, 128
        %1786 = vxpose.xlu0.b32.cont [7/16] 0.0, 128
        %1787 = vxpose.xlu0.b32.cont [8/16] 0.0, 128
        %1788 = vxpose.xlu0.b32.cont [9/16] 0.0, 128
        %1789 = vxpose.xlu0.b32.cont [10/16] 0.0, 128
        %1790 = vxpose.xlu0.b32.cont [11/16] 0.0, 128
        %1791 = vxpose.xlu0.b32.cont [12/16] 0.0, 128
        %1792 = vxpose.xlu0.b32.cont [13/16] 0.0, 128
        %1793 = vxpose.xlu0.b32.cont [14/16] 0.0, 128
        %1794 = vxpose.xlu0.b32.cont [15/16] 0.0, 128
        %1795 = vxpose.xlu0.b32.end [16/16] 0.0, 128
        %v1796 = vpop.trf.xlu0
        %v1797 = vpop.trf.xlu0
        %v1798 = vpop.trf.xlu0
        %v1799 = vpop.trf.xlu0
        %v1800 = vpop.trf.xlu0
        %v1801 = vpop.trf.xlu0
        %v1802 = vpop.trf.xlu0
        %v1803 = vpop.trf.xlu0
        %v1804 = vpop.trf.xlu0
        %v1805 = vpop.trf.xlu0
        %v1806 = vpop.trf.xlu0
        %v1807 = vpop.trf.xlu0
        %v1808 = vpop.trf.xlu0
        %v1809 = vpop.trf.xlu0
        %v1810 = vpop.trf.xlu0
        %v1811 = vpop.trf.xlu0
        %v1812 = vrot.slane %v1764, 4
        %vm1813 = vcmask 1047556
        %v1814 = vsel %vm1813, %v1812, %v1700
        %v1815 = vrot.slane %v1700, 4
        %v1816 = vsel %vm1813, %v1764, %v1815
        %v1818 = vunpack.c.l.s4 1983009808
        %v1819 = vunpack.c.0.s8 %v1818
        %v1820 = vperm.slane %v1814, %v1819
        %v1822 = vunpack.c.l.s4 1983009808
        %v1823 = vunpack.c.0.s8 %v1822
        %v1824 = vperm.slane %v1816, %v1823
        %v1825 = vrot.slane %v1796, 4
        %v1826 = vsel %vm1813, %v1825, %v1732
        %v1827 = vrot.slane %v1732, 4
        %v1828 = vsel %vm1813, %v1796, %v1827
        %v1830 = vunpack.c.l.s4 1983009808
        %v1831 = vunpack.c.0.s8 %v1830
        %v1832 = vperm.slane %v1826, %v1831
        %v1834 = vunpack.c.l.s4 1983009808
        %v1835 = vunpack.c.0.s8 %v1834
        %v1836 = vperm.slane %v1828, %v1835
        %v1837 = vrot.slane %v1832, 4
        %v1838 = vsel %vm1813, %v1837, %v1820
        %v1839 = vrot.slane %v1820, 4
        %v1840 = vsel %vm1813, %v1832, %v1839
        %v1842 = vunpack.c.l.s4 1934713408
        %v1843 = vunpack.c.0.s8 %v1842
        %v1844 = vperm.slane %v1838, %v1843
        %v1846 = vunpack.c.l.s4 1934713408
        %v1847 = vunpack.c.0.s8 %v1846
        %v1848 = vperm.slane %v1840, %v1847
        %v1849 = vrot.slane %v1836, 4
        %v1850 = vsel %vm1813, %v1849, %v1824
        %v1851 = vrot.slane %v1824, 4
        %v1852 = vsel %vm1813, %v1836, %v1851
        %v1854 = vunpack.c.l.s4 1934713408
        %v1855 = vunpack.c.0.s8 %v1854
        %v1856 = vperm.slane %v1850, %v1855
        %v1858 = vunpack.c.l.s4 1934713408
        %v1859 = vunpack.c.0.s8 %v1858
        %v1860 = vperm.slane %v1852, %v1859
        %v1861 = vrot.slane %v1844, 4
        %v1862 = vsel %vm1813, 0.0, %v1861
        %v1863 = vrot.slane %v1848, 4
        %v1864 = vsel %vm1813, 0.0, %v1863
        %v1865 = vrot.slane %v1856, 4
        %v1866 = vsel %vm1813, 0.0, %v1865
        %v1867 = vrot.slane %v1860, 4
        %v1868 = vsel %vm1813, 0.0, %v1867
        %v1869 = vsel %vm1813, %v1863, %v1844
        %v1871 = vunpack.c.l.s4 1983009808
        %v1872 = vunpack.c.0.s8 %v1871
        %v1873 = vperm.slane %v1869, %v1872
        %v1874 = vrot.slane %v1864, 4
        %v1875 = vsel %vm1813, %v1874, %v1862
        %v1877 = vunpack.c.l.s4 1983009808
        %v1878 = vunpack.c.0.s8 %v1877
        %v1879 = vperm.slane %v1875, %v1878
        %v1880 = vsel %vm1813, %v1867, %v1856
        %v1882 = vunpack.c.l.s4 1983009808
        %v1883 = vunpack.c.0.s8 %v1882
        %v1884 = vperm.slane %v1880, %v1883
        %v1885 = vrot.slane %v1868, 4
        %v1886 = vsel %vm1813, %v1885, %v1866
        %v1888 = vunpack.c.l.s4 1983009808
        %v1889 = vunpack.c.0.s8 %v1888
        %v1890 = vperm.slane %v1886, %v1889
        %v1891 = vrot.slane %v1879, 4
        %v1892 = vsel %vm1813, %v1891, %v1873
        %v1893 = vrot.slane %v1873, 4
        %v1894 = vsel %vm1813, %v1879, %v1893
        %v1896 = vunpack.c.l.s4 1934713408
        %v1897 = vunpack.c.0.s8 %v1896
        %v1898 = vperm.slane %v1892, %v1897
        %v1900 = vunpack.c.l.s4 1934713408
        %v1901 = vunpack.c.0.s8 %v1900
        %v1902 = vperm.slane %v1894, %v1901
        %v1903 = vrot.slane %v1890, 4
        %v1904 = vsel %vm1813, %v1903, %v1884
        %v1905 = vrot.slane %v1884, 4
        %v1906 = vsel %vm1813, %v1890, %v1905
        %v1908 = vunpack.c.l.s4 1934713408
        %v1909 = vunpack.c.0.s8 %v1908
        %v1910 = vperm.slane %v1904, %v1909
        %v1912 = vunpack.c.l.s4 1934713408
        %v1913 = vunpack.c.0.s8 %v1912
        %v1914 = vperm.slane %v1906, %v1913
        %v1915 = vrot.slane %v1910, 4
        %v1916 = vsel %vm1813, %v1915, %v1898
        %v1917 = vrot.slane %v1898, 4
        %v1918 = vsel %vm1813, %v1910, %v1917
        %v1919 = vrot.slane %v1914, 4
        %v1920 = vsel %vm1813, %v1919, %v1902
        %v1921 = vrot.slane %v1902, 4
        %v1922 = vsel %vm1813, %v1914, %v1921
        %1924 = vrot.lane.b32.xlu0 %v1918, 32
        %v1925 = vpop.permute.xlu0 %1924
        %1928 = vrot.lane.b32.xlu0 %v1920, 64
        %v1929 = vpop.permute.xlu0 %1928
        %1932 = vrot.lane.b32.xlu0 %v1922, 96
        %v1933 = vpop.permute.xlu0 %1932
        %v1935 = vsel %vm1235, %v1916, %v1925
        %vm1936 = vcmask 523264
        %v1937 = vsel %vm1936, %v1935, %v1929
        %vm1938 = vcmask 785408
        %v1939 = vsel %vm1938, %v1937, %v1933
        %v1940 = vld [vmem:[%s764] sm:$0xff]
        %v1941 = vld [vmem:[%s764 + $0x8] sm:$0xff]
        %v1942 = vld [vmem:[%s764 + $0x10] sm:$0xff]
        %v1943 = vld [vmem:[%s764 + $0x18] sm:$0xff]
        %v1944 = vld [vmem:[%s764 + $0x20] sm:$0xff]
        %v1945 = vld [vmem:[%s764 + $0x28] sm:$0xff]
        %v1946 = vld [vmem:[%s764 + $0x30] sm:$0xff]
        %v1947 = vld [vmem:[%s764 + $0x38] sm:$0xff]
        %v1948 = vld [vmem:[%s764 + $0x40] sm:$0xff]
        %v1949 = vld [vmem:[%s764 + $0x48] sm:$0xff]
        %v1950 = vld [vmem:[%s764 + $0x50] sm:$0xff]
        %v1951 = vld [vmem:[%s764 + $0x58] sm:$0xff]
        %v1952 = vld [vmem:[%s764 + $0x60] sm:$0xff]
        %v1953 = vld [vmem:[%s764 + $0x68] sm:$0xff]
        %v1954 = vld [vmem:[%s764 + $0x70] sm:$0xff]
        %v1955 = vld [vmem:[%s764 + $0x78] sm:$0xff]
        %v1956 = vld [vmem:[%s890] sm:$0x1]
        %v1958 = vperm.slane %v1956, 0
        %1960 = vmatpush.msra.mxu0 %v1955
        %1961 = vmatpush.msra.mxu0 %v1954
        %1962 = vmatpush.msra.mxu0 %v1953
        %1963 = vmatpush.msra.mxu0 %v1952
        %1964 = vmatpush.msra.mxu0 %v1951
        %1965 = vmatpush.msra.mxu0 %v1950
        %1966 = vmatpush.msra.mxu0 %v1949
        %1967 = vmatpush.msra.mxu0 %v1948
        %1968 = vmatpush.msra.mxu0 %v1947
        %1969 = vmatpush.msra.mxu0 %v1946
        %1970 = vmatpush.msra.mxu0 %v1945
        %1971 = vmatpush.msra.mxu0 %v1944
        %1972 = vmatpush.msra.mxu0 %v1943
        %1973 = vmatpush.msra.mxu0 %v1942
        %1974 = vmatpush.msra.mxu0 %v1941
        %1975 = vmatpush.msra.mxu0 %v1940
        %1976 = vmatmul.f32.gmra.mxu0 %v1939
        %v1977 = vpop.f32.mrf.mxu0
        %v1978 = vadd.f32 %v1958, %v1977
        %1979 = vdwg.mxu0
        %v1980 = vadd.f32 %v909, %v1978
        %v1981 = vld [vmem:[%s893] sm:$0x1]
        %v1982 = vld [vmem:[%s896] sm:$0x1]
        %1983 = vadd.xlane.f32.xlu0 %v1980
        %v1984 = vpop.xlane.xlu0 %1983
        %v1985 = vmul.f32 %v1984, 0.03125
        %v1986 = vsub.f32 %v1980, %v1985
        %v1987 = vmul.f32 %v1986, %v916
        %v1988 = vmul.f32 %v1987, %v1987
        %1989 = vadd.xlane.f32.xlu0 %v1988
        %v1990 = vpop.xlane.xlu0 %1989
        %v1991 = vmul.f32 %v1990, 0.032258064
        %v1993 = vperm.slane %v1981, 0
        %v1995 = vmul.f32 %v1993, %v1986
        %v1996 = vrsqrt.pop %v1991
        %v1997 = vmul.f32 %v1996, %v1991
        %v1998 = vmul.f32 %v1997, %v1996
        %v1999 = vmul.f32 0.5, %v1998
        %v2000 = vsub.f32 1.5, %v1999
        %v2001 = vmul.f32 %v1996, %v2000
        %v2002 = vmul.f32 %v1991, %v2001
        %vm2003 = vcmp.eq.f32.partialorder %v1991, inf
        %v2004 = vsel %vm2003, %v1991, %v2002
        %vm2005 = vcmp.eq.f32.partialorder %v1991, 0.0
        %v2006 = vand.u32 %v1991, 2147483648
        %v2007 = vsel %vm2005, %v2006, %v2004
        %v2008 = vadd.f32 %v2007, 1e-06
        %v2009 = vrcp.pop %v2008
        %v2010 = vmul.f32 %v2008, %v2009
        %v2011 = vsub.f32 1.0, %v2010
        %v2012 = vmul.f32 %v2009, %v2011
        %v2013 = vadd.f32 %v2009, %v2012
        %vm2014 = vweird.f32 %v2008
        %vm2015 = vweird.f32 %v2009
        %vm2016 = vmor %vm2014, %vm2015
        %v2017 = vsel %vm2016, %v2009, %v2013
        %v2018 = vand.u32 2147483647, %v2008
        %vm2019 = vcmp.eq.f32.partialorder %v2018, 8.507059e+37
        %v2020 = vand.u32 %v2008, 2147483648
        %v2021 = vor.u32 1.1754944e-38, %v2020
        %v2022 = vsel %vm2019, %v2021, %v2017
        %v2023 = vmul.f32 %v1995, %v2022
        %v2025 = vperm.slane %v1982, 0
        %v2027 = vadd.f32 %v2023, %v2025
        %v2028 = vld [vmem:[%s774] sm:$0xff]
        %v2029 = vld [vmem:[%s774 + $0x8] sm:$0xff]
        %v2030 = vld [vmem:[%s774 + $0x10] sm:$0xff]
        %v2031 = vld [vmem:[%s774 + $0x18] sm:$0xff]
        %v2032 = vld [vmem:[%s774 + $0x20] sm:$0xff]
        %v2033 = vld [vmem:[%s774 + $0x28] sm:$0xff]
        %v2034 = vld [vmem:[%s774 + $0x30] sm:$0xff]
        %v2035 = vld [vmem:[%s774 + $0x38] sm:$0xff]
        %v2036 = vld [vmem:[%s774 + $0x40] sm:$0xff]
        %v2037 = vld [vmem:[%s774 + $0x48] sm:$0xff]
        %v2038 = vld [vmem:[%s774 + $0x50] sm:$0xff]
        %v2039 = vld [vmem:[%s774 + $0x58] sm:$0xff]
        %v2040 = vld [vmem:[%s774 + $0x60] sm:$0xff]
        %v2041 = vld [vmem:[%s774 + $0x68] sm:$0xff]
        %v2042 = vld [vmem:[%s774 + $0x70] sm:$0xff]
        %v2043 = vld [vmem:[%s774 + $0x78] sm:$0xff]
        %v2044 = vld [vmem:[%s899] sm:$0x1]
        %v2046 = vperm.slane %v2044, 0
        %2048 = vmatpush.msra.mxu0 %v2043
        %2049 = vmatpush.msra.mxu0 %v2042
        %2050 = vmatpush.msra.mxu0 %v2041
        %2051 = vmatpush.msra.mxu0 %v2040
        %2052 = vmatpush.msra.mxu0 %v2039
        %2053 = vmatpush.msra.mxu0 %v2038
        %2054 = vmatpush.msra.mxu0 %v2037
        %2055 = vmatpush.msra.mxu0 %v2036
        %2056 = vmatpush.msra.mxu0 %v2035
        %2057 = vmatpush.msra.mxu0 %v2034
        %2058 = vmatpush.msra.mxu0 %v2033
        %2059 = vmatpush.msra.mxu0 %v2032
        %2060 = vmatpush.msra.mxu0 %v2031
        %2061 = vmatpush.msra.mxu0 %v2030
        %2062 = vmatpush.msra.mxu0 %v2029
        %2063 = vmatpush.msra.mxu0 %v2028
        %2064 = vmatmul.f32.gmra.mxu0 %v2027
        %v2065 = vpop.f32.mrf.mxu0
        %v2066 = vadd.f32 %v2046, %v2065
        %2067 = vdwg.mxu0
        %v2068 = vmax.f32 %v2066, 0.0
        %v2069 = vld [vmem:[%s784] sm:$0xff]
        %v2070 = vld [vmem:[%s784 + $0x8] sm:$0xff]
        %v2071 = vld [vmem:[%s784 + $0x10] sm:$0xff]
        %v2072 = vld [vmem:[%s784 + $0x18] sm:$0xff]
        %v2073 = vld [vmem:[%s784 + $0x20] sm:$0xff]
        %v2074 = vld [vmem:[%s784 + $0x28] sm:$0xff]
        %v2075 = vld [vmem:[%s784 + $0x30] sm:$0xff]
        %v2076 = vld [vmem:[%s784 + $0x38] sm:$0xff]
        %v2077 = vld [vmem:[%s784 + $0x40] sm:$0xff]
        %v2078 = vld [vmem:[%s784 + $0x48] sm:$0xff]
        %v2079 = vld [vmem:[%s784 + $0x50] sm:$0xff]
        %v2080 = vld [vmem:[%s784 + $0x58] sm:$0xff]
        %v2081 = vld [vmem:[%s784 + $0x60] sm:$0xff]
        %v2082 = vld [vmem:[%s784 + $0x68] sm:$0xff]
        %v2083 = vld [vmem:[%s784 + $0x70] sm:$0xff]
        %v2084 = vld [vmem:[%s784 + $0x78] sm:$0xff]
        %v2085 = vld [vmem:[%s902] sm:$0x1]
        %v2087 = vperm.slane %v2085, 0
        %2089 = vmatpush.msra.mxu0 %v2084
        %2090 = vmatpush.msra.mxu0 %v2083
        %2091 = vmatpush.msra.mxu0 %v2082
        %2092 = vmatpush.msra.mxu0 %v2081
        %2093 = vmatpush.msra.mxu0 %v2080
        %2094 = vmatpush.msra.mxu0 %v2079
        %2095 = vmatpush.msra.mxu0 %v2078
        %2096 = vmatpush.msra.mxu0 %v2077
        %2097 = vmatpush.msra.mxu0 %v2076
        %2098 = vmatpush.msra.mxu0 %v2075
        %2099 = vmatpush.msra.mxu0 %v2074
        %2100 = vmatpush.msra.mxu0 %v2073
        %2101 = vmatpush.msra.mxu0 %v2072
        %2102 = vmatpush.msra.mxu0 %v2071
        %2103 = vmatpush.msra.mxu0 %v2070
        %2104 = vmatpush.msra.mxu0 %v2069
        %2105 = vmatmul.f32.gmra.mxu0 %v2068
        %v2106 = vpop.f32.mrf.mxu0
        %v2107 = vadd.f32 %v2087, %v2106
        %2108 = vdwg.mxu0
        %v2109 = vadd.f32 %v1980, %v2107
        %2110 = vst [vmem:[#allocation2] sm:$0xff] %v2109
        %p2111 = scmp.eq.s32.totalorder %s50, 1
        // Predicated region
        $region121: #{tpu_custom_call.1} parent=83 // pred_check
          %p2112 = pneg %p2111
        $region122: #{tpu_custom_call.1} parent=83 // pred_check_branch
          %2114 = sbr.rel (%p2112) target = $region124
        $region123: #{tpu_custom_call.1} parent=83 // pred_region
          %v2115 = vld [vmem:[%s14] sm:$0x1]
          %v2116 = vld [vmem:[%s15] sm:$0x1]
          %2117 = vadd.xlane.f32.xlu0 %v2109
          %v2118 = vpop.xlane.xlu0 %2117
          %v2119 = vmul.f32 %v2118, 0.03125
          %v2120 = vsub.f32 %v2109, %v2119
          %v2121 = vmul.f32 %v2120, %v916
          %v2122 = vmul.f32 %v2121, %v2121
          %2123 = vadd.xlane.f32.xlu0 %v2122
          %v2124 = vpop.xlane.xlu0 %2123
          %v2125 = vmul.f32 %v2124, 0.032258064
          %v2127 = vperm.slane %v2115, 0
          %v2129 = vmul.f32 %v2127, %v2120
          %v2130 = vrsqrt.pop %v2125
          %v2131 = vmul.f32 %v2130, %v2125
          %v2132 = vmul.f32 %v2131, %v2130
          %v2133 = vmul.f32 0.5, %v2132
          %v2134 = vsub.f32 1.5, %v2133
          %v2135 = vmul.f32 %v2130, %v2134
          %v2136 = vmul.f32 %v2125, %v2135
          %vm2137 = vcmp.eq.f32.partialorder %v2125, inf
          %v2138 = vsel %vm2137, %v2125, %v2136
          %vm2139 = vcmp.eq.f32.partialorder %v2125, 0.0
          %v2140 = vand.u32 %v2125, 2147483648
          %v2141 = vsel %vm2139, %v2140, %v2138
          %v2142 = vadd.f32 %v2141, 1e-06
          %v2143 = vrcp.pop %v2142
          %v2144 = vmul.f32 %v2142, %v2143
          %v2145 = vsub.f32 1.0, %v2144
          %v2146 = vmul.f32 %v2143, %v2145
          %v2147 = vadd.f32 %v2143, %v2146
          %vm2148 = vweird.f32 %v2142
          %vm2149 = vweird.f32 %v2143
          %vm2150 = vmor %vm2148, %vm2149
          %v2151 = vsel %vm2150, %v2143, %v2147
          %v2152 = vand.u32 2147483647, %v2142
          %vm2153 = vcmp.eq.f32.partialorder %v2152, 8.507059e+37
          %v2154 = vand.u32 %v2142, 2147483648
          %v2155 = vor.u32 1.1754944e-38, %v2154
          %v2156 = vsel %vm2153, %v2155, %v2151
          %v2157 = vmul.f32 %v2129, %v2156
          %v2159 = vperm.slane %v2116, 0
          %v2161 = vadd.f32 %v2157, %v2159
          %2162 = vst [vmem:[%s884] sm:$0xff] %v2161
        $region124: #{tpu_custom_call.1} parent=83 // pred_fallthru
          _
        %s2163 = sand.u32 %s471, 1
        %s2164 = scalar_lea.sflag [#allocation5], %s2163
        %s2165 = sand.u32 %s471, 1
        %s2166 = smul.addr %s2165, 8
        %s2167 = scalar_lea.vmem [#allocation17], %s2166
        // Predicated region
        $region125: #{tpu_custom_call.1} parent=83 // pred_check
          %p2168 = pneg %p481
        $region126: #{tpu_custom_call.1} parent=83 // pred_check_branch
          %2170 = sbr.rel (%p2168) target = $region128
        $region127: #{tpu_custom_call.1} parent=83 // pred_region
          %2172 = vsyncadd %s2164, 0
          %s2173 = smul.addr %s49, 8
          %s2174 = scalar_lea.hbm %s16, %s2173
          %s2176 = sshll.u32 %s2167, 4
          %s2177 = int_to_ptr.vmem [resolvable:$true] %s2176
          %s2178 = sshll.u32 %s2174, 4
          %s2179 = int_to_ptr.hbm [resolvable:$true] %s2178
          %2181 = dma.vmem_to_hbm [thread:$0]  %s2177, 128, %s2179, %s2164
        $region128: #{tpu_custom_call.1} parent=83 // pred_fallthru
          _
      $region84: #{tpu_custom_call.1} parent=5 // pred_fallthru
        _
      %p2182 = scmp.le.s32.totalorder 2, %s40
      // Predicated region
      $region129: #{tpu_custom_call.1} parent=5 // pred_check
        %p2183 = pneg %p2182
      $region130: #{tpu_custom_call.1} parent=5 // pred_check_branch
        %2185 = sbr.rel (%p2183) target = $region132
      $region131: #{tpu_custom_call.1} parent=5 // pred_region
        %s2186 = ssub.s32 %s40, 2
        // Predicated region
        $region133: #{tpu_custom_call.1} parent=131 // pred_check
          %p2187 = pneg %p487
        $region134: #{tpu_custom_call.1} parent=131 // pred_check_branch
          %2189 = sbr.rel (%p2187) target = $region136
        $region135: #{tpu_custom_call.1} parent=131 // pred_region
          %s2190 = sand.u32 %s472, 1
          %s2191 = scalar_lea.sflag [#allocation5], %s2190
          %s2192 = sand.u32 %s472, 1
          %s2193 = smul.addr %s2192, 8
          %s2194 = scalar_lea.vmem [#allocation17], %s2193
          %2196 = dma.done %s2191, 128
        $region136: #{tpu_custom_call.1} parent=131 // pred_fallthru
          _
      $region132: #{tpu_custom_call.1} parent=5 // pred_fallthru
        _
    $region6: #{tpu_custom_call.1} parent=1 // loop_footer
      %s44 = sadd.s32 1, %s40
    $region7: #{tpu_custom_call.1} parent=1 // loop_footer_branch
      %39 = sbr.rel target = $region3
    $region8: #{tpu_custom_call.1} parent=1 // loop_exit
      _
    %2197 = vsyncpa [#allocation4], 1
    %s2198 = scalar_lea.sflag [#allocation4], 1
    %2199 = vsyncpa %s2198, 1
    %2200 = vsyncpa [#allocation7], 1
    %s2201 = scalar_lea.sflag [#allocation7], 1
    %2202 = vsyncpa %s2201, 1
    %2203 = vsyncpa [#allocation10], 1
    %s2204 = scalar_lea.sflag [#allocation10], 1
    %2205 = vsyncpa %s2204, 1
    %2206 = vsyncpa [#allocation13], 1
    %s2207 = scalar_lea.sflag [#allocation13], 1
    %2208 = vsyncpa %s2207, 1
    %2209 = vsyncpa [#allocation16], 1
    %s2210 = scalar_lea.sflag [#allocation16], 1
    %2211 = vsyncpa %s2210, 1
    %2212 = vsyncpa [#allocation5], 1
    %s2213 = scalar_lea.sflag [#allocation5], 1
    %2214 = vsyncpa %s2213, 1

</llo_original>
